<compile_context>
chip_gen: v5e
topology: v5e:2x2
jax: 0.10.0
libtpu: 0.0.40
codegen_flags: <defaults>
</compile_context>

<pallas_src>
import jax
import jax.numpy as jnp
import numpy as np
from jax import lax
from jax.experimental import pallas as pl
from jax.experimental.pallas import tpu as pltpu

LANE = 128
SUBLANE = 8


def _relu(v):
    return jnp.maximum(v, 0.0)


def _make_conv_kernel(C_in, C_out, K, H, W, Bg, activation):
    """Direct valid conv; batch on (sublane-group, lane); SMEM scalar weights."""
    Ho, Wo = H - K + 1, W - K + 1

    def kernel(w_ref, b_ref, x_ref, o_ref):
        # w_ref : SMEM (C_out*C_in*K*K,)  flat OIHW weights
        # b_ref : SMEM (C_out,)
        # x_ref : VMEM (C_in, H, W, Bg, 128)      -- batch on (sublane, lane)
        # o_ref : VMEM (C_out, Ho, Wo, Bg, 128)
        def co_body(co, carry):
            bias = b_ref[co]
            # Hoist the C_in*K*K scalar weight reads out of the per-row loop.
            ws = [w_ref[(co * C_in + ci) * K * K + di * K + dj]
                  for ci in range(C_in) for di in range(K) for dj in range(K)]

            def ho_body(ho, c2):
                acc = jnp.zeros((Wo, Bg, LANE), jnp.float32)   # ~Wo vregs
                t = 0
                for ci in range(C_in):
                    for di in range(K):
                        # One input row, loaded once and reused for all K dj taps.
                        # Dims 0/1 are untiled -> dynamic index is a pure offset.
                        row = x_ref[ci, ho + di]               # (W, Bg, 128)
                        for dj in range(K):
                            acc = acc + ws[t] * row[dj:dj + Wo]
                            t += 1
                o_ref[co, ho] = activation(acc + bias).astype(o_ref.dtype)
                return c2

            return lax.fori_loop(0, Ho, ho_body, carry)

        lax.fori_loop(0, C_out, co_body, 0)

    return kernel


def conv2d_cppn_forward(x, w, b, *, padding=0, activation=_relu):
    """Pallas equivalent of Conv2DCppn.forward (NCHW in, NCHW out)."""
    N, C_in, H, W = x.shape
    C_out, C_in_w, kH, kW = w.shape
    assert C_in == C_in_w, '{} != {}'.format(C_in, C_in_w)   # mirrors module assert
    assert kH == kW
    K = kH

    if padding:
        x = jnp.pad(x, ((0, 0), (0, 0), (padding, padding), (padding, padding)))
        H += 2 * padding
        W += 2 * padding
    Ho, Wo = H - K + 1, W - K + 1
    assert Ho >= 1 and Wo >= 1

    # Batch blocking: pad batch to a multiple of 128 (always lane-dense); if
    # more than 8 lane-groups are needed, pad to a multiple of 1024 so every
    # block is a full (8, 128) batch tile and the grid iterates batch blocks.
    groups = pl.cdiv(N, LANE)
    if groups <= SUBLANE:
        Bg, n_blocks = groups, 1            # single full-extent block (legal)
    else:
        Bg, n_blocks = SUBLANE, pl.cdiv(groups, SUBLANE)
    G_total = Bg * n_blocks
    Npad = G_total * LANE
    if Npad != N:
        x = jnp.pad(x, ((0, Npad - N), (0, 0), (0, 0), (0, 0)))

    # Wrapper-side relayout (XLA, not in-kernel): batch -> (group, lane) minor.
    x_l = jnp.transpose(x.reshape(G_total, LANE, C_in, H, W),
                        (2, 3, 4, 0, 1)).astype(jnp.float32)   # (C_in,H,W,G,128)
    w_flat = w.reshape(-1).astype(jnp.float32)                 # (C_out*C_in*K*K,)
    b_flat = b.reshape(-1).astype(jnp.float32)                 # (C_out,)

    in_block = C_in * H * W * Bg * LANE * 4
    out_block = C_out * Ho * Wo * Bg * LANE * 4
    # Double-buffered in/out blocks + headroom; capped below v7x physical VMEM.
    vmem_limit = int(min(max(2 * (in_block + out_block) + (4 << 20), 32 << 20),
                         64 << 20))
    # TODO(synk): for very large C_in*H*W a single (Bg=8) batch block can exceed
    # VMEM; an output-row grid axis (overlapping input windows) would be needed.

    kernel = _make_conv_kernel(C_in, C_out, K, H, W, Bg, activation)
    y_l = pl.pallas_call(
        kernel,
        out_shape=jax.ShapeDtypeStruct((C_out, Ho, Wo, G_total, LANE), jnp.float32),
        grid=(n_blocks,),
        in_specs=[
            pl.BlockSpec(memory_space=pltpu.MemorySpace.SMEM),           # weights
            pl.BlockSpec(memory_space=pltpu.MemorySpace.SMEM),           # bias
            pl.BlockSpec((C_in, H, W, Bg, LANE), lambda n: (0, 0, 0, n, 0)),
        ],
        out_specs=pl.BlockSpec((C_out, Ho, Wo, Bg, LANE), lambda n: (0, 0, 0, n, 0)),
        compiler_params=pltpu.CompilerParams(
            dimension_semantics=("parallel",),     # megacore sharding on v7x
            vmem_limit_bytes=vmem_limit),
    )(w_flat, b_flat, x_l)

    # Back to PyTorch NCHW layout, drop batch padding.
    y = jnp.transpose(y_l, (3, 4, 0, 1, 2)).reshape(Npad, C_out, Ho, Wo)
    return y[:N]


def make_cppn_params(C_in, C_out, K, z=0.0):
    """Deterministic synthetic CPPN (parameter construction, mirrors __init__)."""
    c_out = jnp.arange(C_out, dtype=jnp.float32)
    c_in = jnp.arange(C_in, dtype=jnp.float32)
    kx = jnp.arange(K, dtype=jnp.float32)
    ky = jnp.arange(K, dtype=jnp.float32)
    cc_out, cc_in, kk_x, kk_y = jnp.meshgrid(c_out, c_in, kx, ky, indexing="ij")
    w = 0.3 * jnp.tanh(jnp.sin(1.3 * kk_x - 0.7 * kk_y)
                       + jnp.cos(0.9 * cc_in + 0.4 * cc_out)
                       + 0.5 * jnp.sin(0.11 * (kk_x * kk_y - cc_in * cc_out) + z))
    b = 0.1 * jnp.tanh(jnp.sin(0.8 * c_out + z) + 0.3 * c_out)
    return w.astype(jnp.float32), b.astype(jnp.float32)


def _reference(x, w, b, padding=0, activation=_relu):
    y = jax.lax.conv_general_dilated(
        x, w, window_strides=(1, 1),
        padding=[(padding, padding), (padding, padding)],
        dimension_numbers=("NCHW", "OIHW", "NCHW"))
    return activation(y + b[None, :, None, None])


if __name__ == "__main__":
    C_in, C_out, K = 4, 8, 3
    w, b = make_cppn_params(C_in, C_out, K, z=0.0)

    # Small deterministic input (batch=2, channels=4, spatial=16) -> padded to
    # a single lane-dense (1, 128) batch group.
    x = jax.random.uniform(jax.random.PRNGKey(0), (2, C_in, 16, 16), jnp.float32)
    out = jax.block_until_ready(conv2d_cppn_forward(x, w, b, padding=0))
    ref = jax.block_until_ready(_reference(x, w, b, padding=0))
    assert out.shape == (2, C_out, 14, 14), out.shape
    np.testing.assert_allclose(np.asarray(out), np.asarray(ref), rtol=1e-5, atol=1e-5)

    # Single-block path with several lane groups + zero padding.
    x2 = jax.random.normal(jax.random.PRNGKey(1), (260, C_in, 16, 16), jnp.float32)
    out2 = jax.block_until_ready(conv2d_cppn_forward(x2, w, b, padding=1))
    ref2 = jax.block_until_ready(_reference(x2, w, b, padding=1))
    assert out2.shape == (260, C_out, 16, 16), out2.shape
    np.testing.assert_allclose(np.asarray(out2), np.asarray(ref2), rtol=1e-4, atol=1e-5)

    # Multi-block path (grid over 1024-image batch blocks, Bg=8).
    x3 = jax.random.normal(jax.random.PRNGKey(2), (1300, C_in, 16, 16), jnp.float32)
    out3 = jax.block_until_ready(conv2d_cppn_forward(x3, w, b, padding=1))
    ref3 = jax.block_until_ready(_reference(x3, w, b, padding=1))
    assert out3.shape == (1300, C_out, 16, 16), out3.shape
    np.testing.assert_allclose(np.asarray(out3), np.asarray(ref3), rtol=1e-4, atol=1e-5)

    print("KERNEL_OK")
</pallas_src>

<mosaic_0001>
module attributes {stable_mosaic.version = 11 : i64} {
  func.func @kernel(%arg0: i32, %arg1: memref<288xf32, #tpu.memory_space<smem>>, %arg2: memref<8xf32, #tpu.memory_space<smem>>, %arg3: memref<4x16x16x1x128xf32, #tpu.memory_space<vmem>>, %arg4: memref<8x14x14x1x128xf32, #tpu.memory_space<vmem>>) attributes {dimension_semantics = [#tpu.dimension_semantics<parallel>], iteration_bounds = array<i64: 1>, scalar_prefetch = 0 : i64, scratch_operands = 0 : i64, tpu.core_type = #tpu.core_type<tc>, window_params = [{transform_indices = @transform_0, window_bounds = array<i64: 288>}, {transform_indices = @transform_1, window_bounds = array<i64: 8>}, {transform_indices = @transform_2, window_bounds = array<i64: 4, 16, 16, 1, 128>}, {transform_indices = @transform_3, window_bounds = array<i64: 8, 14, 14, 1, 128>}]} {
    %c0_i32 = arith.constant 0 : i32
    %c8_i32 = arith.constant 8 : i32
    %0 = arith.addi %c0_i32, %c8_i32 : i32
    %c1_i32 = arith.constant 1 : i32
    scf.for %arg5 = %c0_i32 to %0 step %c1_i32  : i32 {
      %1 = arith.index_cast %arg5 : i32 to index
      %2 = memref.load %arg2[%1] : memref<8xf32, #tpu.memory_space<smem>>
      %c4_i32 = arith.constant 4 : i32
      %3 = arith.muli %arg5, %c4_i32 : i32
      %c0_i32_1 = arith.constant 0 : i32
      %4 = arith.addi %3, %c0_i32_1 : i32
      %c3_i32 = arith.constant 3 : i32
      %5 = arith.muli %4, %c3_i32 : i32
      %c3_i32_2 = arith.constant 3 : i32
      %6 = arith.muli %5, %c3_i32_2 : i32
      %c0_i32_3 = arith.constant 0 : i32
      %7 = arith.addi %6, %c0_i32_3 : i32
      %c0_i32_4 = arith.constant 0 : i32
      %8 = arith.addi %7, %c0_i32_4 : i32
      %9 = arith.index_cast %8 : i32 to index
      %10 = memref.load %arg1[%9] : memref<288xf32, #tpu.memory_space<smem>>
      %c4_i32_5 = arith.constant 4 : i32
      %11 = arith.muli %arg5, %c4_i32_5 : i32
      %c0_i32_6 = arith.constant 0 : i32
      %12 = arith.addi %11, %c0_i32_6 : i32
      %c3_i32_7 = arith.constant 3 : i32
      %13 = arith.muli %12, %c3_i32_7 : i32
      %c3_i32_8 = arith.constant 3 : i32
      %14 = arith.muli %13, %c3_i32_8 : i32
      %c0_i32_9 = arith.constant 0 : i32
      %15 = arith.addi %14, %c0_i32_9 : i32
      %c1_i32_10 = arith.constant 1 : i32
      %16 = arith.addi %15, %c1_i32_10 : i32
      %17 = arith.index_cast %16 : i32 to index
      %18 = memref.load %arg1[%17] : memref<288xf32, #tpu.memory_space<smem>>
      %c4_i32_11 = arith.constant 4 : i32
      %19 = arith.muli %arg5, %c4_i32_11 : i32
      %c0_i32_12 = arith.constant 0 : i32
      %20 = arith.addi %19, %c0_i32_12 : i32
      %c3_i32_13 = arith.constant 3 : i32
      %21 = arith.muli %20, %c3_i32_13 : i32
      %c3_i32_14 = arith.constant 3 : i32
      %22 = arith.muli %21, %c3_i32_14 : i32
      %c0_i32_15 = arith.constant 0 : i32
      %23 = arith.addi %22, %c0_i32_15 : i32
      %c2_i32 = arith.constant 2 : i32
      %24 = arith.addi %23, %c2_i32 : i32
      %25 = arith.index_cast %24 : i32 to index
      %26 = memref.load %arg1[%25] : memref<288xf32, #tpu.memory_space<smem>>
      %c4_i32_16 = arith.constant 4 : i32
      %27 = arith.muli %arg5, %c4_i32_16 : i32
      %c0_i32_17 = arith.constant 0 : i32
      %28 = arith.addi %27, %c0_i32_17 : i32
      %c3_i32_18 = arith.constant 3 : i32
      %29 = arith.muli %28, %c3_i32_18 : i32
      %c3_i32_19 = arith.constant 3 : i32
      %30 = arith.muli %29, %c3_i32_19 : i32
      %c3_i32_20 = arith.constant 3 : i32
      %31 = arith.addi %30, %c3_i32_20 : i32
      %c0_i32_21 = arith.constant 0 : i32
      %32 = arith.addi %31, %c0_i32_21 : i32
      %33 = arith.index_cast %32 : i32 to index
      %34 = memref.load %arg1[%33] : memref<288xf32, #tpu.memory_space<smem>>
      %c4_i32_22 = arith.constant 4 : i32
      %35 = arith.muli %arg5, %c4_i32_22 : i32
      %c0_i32_23 = arith.constant 0 : i32
      %36 = arith.addi %35, %c0_i32_23 : i32
      %c3_i32_24 = arith.constant 3 : i32
      %37 = arith.muli %36, %c3_i32_24 : i32
      %c3_i32_25 = arith.constant 3 : i32
      %38 = arith.muli %37, %c3_i32_25 : i32
      %c3_i32_26 = arith.constant 3 : i32
      %39 = arith.addi %38, %c3_i32_26 : i32
      %c1_i32_27 = arith.constant 1 : i32
      %40 = arith.addi %39, %c1_i32_27 : i32
      %41 = arith.index_cast %40 : i32 to index
      %42 = memref.load %arg1[%41] : memref<288xf32, #tpu.memory_space<smem>>
      %c4_i32_28 = arith.constant 4 : i32
      %43 = arith.muli %arg5, %c4_i32_28 : i32
      %c0_i32_29 = arith.constant 0 : i32
      %44 = arith.addi %43, %c0_i32_29 : i32
      %c3_i32_30 = arith.constant 3 : i32
      %45 = arith.muli %44, %c3_i32_30 : i32
      %c3_i32_31 = arith.constant 3 : i32
      %46 = arith.muli %45, %c3_i32_31 : i32
      %c3_i32_32 = arith.constant 3 : i32
      %47 = arith.addi %46, %c3_i32_32 : i32
      %c2_i32_33 = arith.constant 2 : i32
      %48 = arith.addi %47, %c2_i32_33 : i32
      %49 = arith.index_cast %48 : i32 to index
      %50 = memref.load %arg1[%49] : memref<288xf32, #tpu.memory_space<smem>>
      %c4_i32_34 = arith.constant 4 : i32
      %51 = arith.muli %arg5, %c4_i32_34 : i32
      %c0_i32_35 = arith.constant 0 : i32
      %52 = arith.addi %51, %c0_i32_35 : i32
      %c3_i32_36 = arith.constant 3 : i32
      %53 = arith.muli %52, %c3_i32_36 : i32
      %c3_i32_37 = arith.constant 3 : i32
      %54 = arith.muli %53, %c3_i32_37 : i32
      %c6_i32 = arith.constant 6 : i32
      %55 = arith.addi %54, %c6_i32 : i32
      %c0_i32_38 = arith.constant 0 : i32
      %56 = arith.addi %55, %c0_i32_38 : i32
      %57 = arith.index_cast %56 : i32 to index
      %58 = memref.load %arg1[%57] : memref<288xf32, #tpu.memory_space<smem>>
      %c4_i32_39 = arith.constant 4 : i32
      %59 = arith.muli %arg5, %c4_i32_39 : i32
      %c0_i32_40 = arith.constant 0 : i32
      %60 = arith.addi %59, %c0_i32_40 : i32
      %c3_i32_41 = arith.constant 3 : i32
      %61 = arith.muli %60, %c3_i32_41 : i32
      %c3_i32_42 = arith.constant 3 : i32
      %62 = arith.muli %61, %c3_i32_42 : i32
      %c6_i32_43 = arith.constant 6 : i32
      %63 = arith.addi %62, %c6_i32_43 : i32
      %c1_i32_44 = arith.constant 1 : i32
      %64 = arith.addi %63, %c1_i32_44 : i32
      %65 = arith.index_cast %64 : i32 to index
      %66 = memref.load %arg1[%65] : memref<288xf32, #tpu.memory_space<smem>>
      %c4_i32_45 = arith.constant 4 : i32
      %67 = arith.muli %arg5, %c4_i32_45 : i32
      %c0_i32_46 = arith.constant 0 : i32
      %68 = arith.addi %67, %c0_i32_46 : i32
      %c3_i32_47 = arith.constant 3 : i32
      %69 = arith.muli %68, %c3_i32_47 : i32
      %c3_i32_48 = arith.constant 3 : i32
      %70 = arith.muli %69, %c3_i32_48 : i32
      %c6_i32_49 = arith.constant 6 : i32
      %71 = arith.addi %70, %c6_i32_49 : i32
      %c2_i32_50 = arith.constant 2 : i32
      %72 = arith.addi %71, %c2_i32_50 : i32
      %73 = arith.index_cast %72 : i32 to index
      %74 = memref.load %arg1[%73] : memref<288xf32, #tpu.memory_space<smem>>
      %c4_i32_51 = arith.constant 4 : i32
      %75 = arith.muli %arg5, %c4_i32_51 : i32
      %c1_i32_52 = arith.constant 1 : i32
      %76 = arith.addi %75, %c1_i32_52 : i32
      %c3_i32_53 = arith.constant 3 : i32
      %77 = arith.muli %76, %c3_i32_53 : i32
      %c3_i32_54 = arith.constant 3 : i32
      %78 = arith.muli %77, %c3_i32_54 : i32
      %c0_i32_55 = arith.constant 0 : i32
      %79 = arith.addi %78, %c0_i32_55 : i32
      %c0_i32_56 = arith.constant 0 : i32
      %80 = arith.addi %79, %c0_i32_56 : i32
      %81 = arith.index_cast %80 : i32 to index
      %82 = memref.load %arg1[%81] : memref<288xf32, #tpu.memory_space<smem>>
      %c4_i32_57 = arith.constant 4 : i32
      %83 = arith.muli %arg5, %c4_i32_57 : i32
      %c1_i32_58 = arith.constant 1 : i32
      %84 = arith.addi %83, %c1_i32_58 : i32
      %c3_i32_59 = arith.constant 3 : i32
      %85 = arith.muli %84, %c3_i32_59 : i32
      %c3_i32_60 = arith.constant 3 : i32
      %86 = arith.muli %85, %c3_i32_60 : i32
      %c0_i32_61 = arith.constant 0 : i32
      %87 = arith.addi %86, %c0_i32_61 : i32
      %c1_i32_62 = arith.constant 1 : i32
      %88 = arith.addi %87, %c1_i32_62 : i32
      %89 = arith.index_cast %88 : i32 to index
      %90 = memref.load %arg1[%89] : memref<288xf32, #tpu.memory_space<smem>>
      %c4_i32_63 = arith.constant 4 : i32
      %91 = arith.muli %arg5, %c4_i32_63 : i32
      %c1_i32_64 = arith.constant 1 : i32
      %92 = arith.addi %91, %c1_i32_64 : i32
      %c3_i32_65 = arith.constant 3 : i32
      %93 = arith.muli %92, %c3_i32_65 : i32
      %c3_i32_66 = arith.constant 3 : i32
      %94 = arith.muli %93, %c3_i32_66 : i32
      %c0_i32_67 = arith.constant 0 : i32
      %95 = arith.addi %94, %c0_i32_67 : i32
      %c2_i32_68 = arith.constant 2 : i32
      %96 = arith.addi %95, %c2_i32_68 : i32
      %97 = arith.index_cast %96 : i32 to index
      %98 = memref.load %arg1[%97] : memref<288xf32, #tpu.memory_space<smem>>
      %c4_i32_69 = arith.constant 4 : i32
      %99 = arith.muli %arg5, %c4_i32_69 : i32
      %c1_i32_70 = arith.constant 1 : i32
      %100 = arith.addi %99, %c1_i32_70 : i32
      %c3_i32_71 = arith.constant 3 : i32
      %101 = arith.muli %100, %c3_i32_71 : i32
      %c3_i32_72 = arith.constant 3 : i32
      %102 = arith.muli %101, %c3_i32_72 : i32
      %c3_i32_73 = arith.constant 3 : i32
      %103 = arith.addi %102, %c3_i32_73 : i32
      %c0_i32_74 = arith.constant 0 : i32
      %104 = arith.addi %103, %c0_i32_74 : i32
      %105 = arith.index_cast %104 : i32 to index
      %106 = memref.load %arg1[%105] : memref<288xf32, #tpu.memory_space<smem>>
      %c4_i32_75 = arith.constant 4 : i32
      %107 = arith.muli %arg5, %c4_i32_75 : i32
      %c1_i32_76 = arith.constant 1 : i32
      %108 = arith.addi %107, %c1_i32_76 : i32
      %c3_i32_77 = arith.constant 3 : i32
      %109 = arith.muli %108, %c3_i32_77 : i32
      %c3_i32_78 = arith.constant 3 : i32
      %110 = arith.muli %109, %c3_i32_78 : i32
      %c3_i32_79 = arith.constant 3 : i32
      %111 = arith.addi %110, %c3_i32_79 : i32
      %c1_i32_80 = arith.constant 1 : i32
      %112 = arith.addi %111, %c1_i32_80 : i32
      %113 = arith.index_cast %112 : i32 to index
      %114 = memref.load %arg1[%113] : memref<288xf32, #tpu.memory_space<smem>>
      %c4_i32_81 = arith.constant 4 : i32
      %115 = arith.muli %arg5, %c4_i32_81 : i32
      %c1_i32_82 = arith.constant 1 : i32
      %116 = arith.addi %115, %c1_i32_82 : i32
      %c3_i32_83 = arith.constant 3 : i32
      %117 = arith.muli %116, %c3_i32_83 : i32
      %c3_i32_84 = arith.constant 3 : i32
      %118 = arith.muli %117, %c3_i32_84 : i32
      %c3_i32_85 = arith.constant 3 : i32
      %119 = arith.addi %118, %c3_i32_85 : i32
      %c2_i32_86 = arith.constant 2 : i32
      %120 = arith.addi %119, %c2_i32_86 : i32
      %121 = arith.index_cast %120 : i32 to index
      %122 = memref.load %arg1[%121] : memref<288xf32, #tpu.memory_space<smem>>
      %c4_i32_87 = arith.constant 4 : i32
      %123 = arith.muli %arg5, %c4_i32_87 : i32
      %c1_i32_88 = arith.constant 1 : i32
      %124 = arith.addi %123, %c1_i32_88 : i32
      %c3_i32_89 = arith.constant 3 : i32
      %125 = arith.muli %124, %c3_i32_89 : i32
      %c3_i32_90 = arith.constant 3 : i32
      %126 = arith.muli %125, %c3_i32_90 : i32
      %c6_i32_91 = arith.constant 6 : i32
      %127 = arith.addi %126, %c6_i32_91 : i32
      %c0_i32_92 = arith.constant 0 : i32
      %128 = arith.addi %127, %c0_i32_92 : i32
      %129 = arith.index_cast %128 : i32 to index
      %130 = memref.load %arg1[%129] : memref<288xf32, #tpu.memory_space<smem>>
      %c4_i32_93 = arith.constant 4 : i32
      %131 = arith.muli %arg5, %c4_i32_93 : i32
      %c1_i32_94 = arith.constant 1 : i32
      %132 = arith.addi %131, %c1_i32_94 : i32
      %c3_i32_95 = arith.constant 3 : i32
      %133 = arith.muli %132, %c3_i32_95 : i32
      %c3_i32_96 = arith.constant 3 : i32
      %134 = arith.muli %133, %c3_i32_96 : i32
      %c6_i32_97 = arith.constant 6 : i32
      %135 = arith.addi %134, %c6_i32_97 : i32
      %c1_i32_98 = arith.constant 1 : i32
      %136 = arith.addi %135, %c1_i32_98 : i32
      %137 = arith.index_cast %136 : i32 to index
      %138 = memref.load %arg1[%137] : memref<288xf32, #tpu.memory_space<smem>>
      %c4_i32_99 = arith.constant 4 : i32
      %139 = arith.muli %arg5, %c4_i32_99 : i32
      %c1_i32_100 = arith.constant 1 : i32
      %140 = arith.addi %139, %c1_i32_100 : i32
      %c3_i32_101 = arith.constant 3 : i32
      %141 = arith.muli %140, %c3_i32_101 : i32
      %c3_i32_102 = arith.constant 3 : i32
      %142 = arith.muli %141, %c3_i32_102 : i32
      %c6_i32_103 = arith.constant 6 : i32
      %143 = arith.addi %142, %c6_i32_103 : i32
      %c2_i32_104 = arith.constant 2 : i32
      %144 = arith.addi %143, %c2_i32_104 : i32
      %145 = arith.index_cast %144 : i32 to index
      %146 = memref.load %arg1[%145] : memref<288xf32, #tpu.memory_space<smem>>
      %c4_i32_105 = arith.constant 4 : i32
      %147 = arith.muli %arg5, %c4_i32_105 : i32
      %c2_i32_106 = arith.constant 2 : i32
      %148 = arith.addi %147, %c2_i32_106 : i32
      %c3_i32_107 = arith.constant 3 : i32
      %149 = arith.muli %148, %c3_i32_107 : i32
      %c3_i32_108 = arith.constant 3 : i32
      %150 = arith.muli %149, %c3_i32_108 : i32
      %c0_i32_109 = arith.constant 0 : i32
      %151 = arith.addi %150, %c0_i32_109 : i32
      %c0_i32_110 = arith.constant 0 : i32
      %152 = arith.addi %151, %c0_i32_110 : i32
      %153 = arith.index_cast %152 : i32 to index
      %154 = memref.load %arg1[%153] : memref<288xf32, #tpu.memory_space<smem>>
      %c4_i32_111 = arith.constant 4 : i32
      %155 = arith.muli %arg5, %c4_i32_111 : i32
      %c2_i32_112 = arith.constant 2 : i32
      %156 = arith.addi %155, %c2_i32_112 : i32
      %c3_i32_113 = arith.constant 3 : i32
      %157 = arith.muli %156, %c3_i32_113 : i32
      %c3_i32_114 = arith.constant 3 : i32
      %158 = arith.muli %157, %c3_i32_114 : i32
      %c0_i32_115 = arith.constant 0 : i32
      %159 = arith.addi %158, %c0_i32_115 : i32
      %c1_i32_116 = arith.constant 1 : i32
      %160 = arith.addi %159, %c1_i32_116 : i32
      %161 = arith.index_cast %160 : i32 to index
      %162 = memref.load %arg1[%161] : memref<288xf32, #tpu.memory_space<smem>>
      %c4_i32_117 = arith.constant 4 : i32
      %163 = arith.muli %arg5, %c4_i32_117 : i32
      %c2_i32_118 = arith.constant 2 : i32
      %164 = arith.addi %163, %c2_i32_118 : i32
      %c3_i32_119 = arith.constant 3 : i32
      %165 = arith.muli %164, %c3_i32_119 : i32
      %c3_i32_120 = arith.constant 3 : i32
      %166 = arith.muli %165, %c3_i32_120 : i32
      %c0_i32_121 = arith.constant 0 : i32
      %167 = arith.addi %166, %c0_i32_121 : i32
      %c2_i32_122 = arith.constant 2 : i32
      %168 = arith.addi %167, %c2_i32_122 : i32
      %169 = arith.index_cast %168 : i32 to index
      %170 = memref.load %arg1[%169] : memref<288xf32, #tpu.memory_space<smem>>
      %c4_i32_123 = arith.constant 4 : i32
      %171 = arith.muli %arg5, %c4_i32_123 : i32
      %c2_i32_124 = arith.constant 2 : i32
      %172 = arith.addi %171, %c2_i32_124 : i32
      %c3_i32_125 = arith.constant 3 : i32
      %173 = arith.muli %172, %c3_i32_125 : i32
      %c3_i32_126 = arith.constant 3 : i32
      %174 = arith.muli %173, %c3_i32_126 : i32
      %c3_i32_127 = arith.constant 3 : i32
      %175 = arith.addi %174, %c3_i32_127 : i32
      %c0_i32_128 = arith.constant 0 : i32
      %176 = arith.addi %175, %c0_i32_128 : i32
      %177 = arith.index_cast %176 : i32 to index
      %178 = memref.load %arg1[%177] : memref<288xf32, #tpu.memory_space<smem>>
      %c4_i32_129 = arith.constant 4 : i32
      %179 = arith.muli %arg5, %c4_i32_129 : i32
      %c2_i32_130 = arith.constant 2 : i32
      %180 = arith.addi %179, %c2_i32_130 : i32
      %c3_i32_131 = arith.constant 3 : i32
      %181 = arith.muli %180, %c3_i32_131 : i32
      %c3_i32_132 = arith.constant 3 : i32
      %182 = arith.muli %181, %c3_i32_132 : i32
      %c3_i32_133 = arith.constant 3 : i32
      %183 = arith.addi %182, %c3_i32_133 : i32
      %c1_i32_134 = arith.constant 1 : i32
      %184 = arith.addi %183, %c1_i32_134 : i32
      %185 = arith.index_cast %184 : i32 to index
      %186 = memref.load %arg1[%185] : memref<288xf32, #tpu.memory_space<smem>>
      %c4_i32_135 = arith.constant 4 : i32
      %187 = arith.muli %arg5, %c4_i32_135 : i32
      %c2_i32_136 = arith.constant 2 : i32
      %188 = arith.addi %187, %c2_i32_136 : i32
      %c3_i32_137 = arith.constant 3 : i32
      %189 = arith.muli %188, %c3_i32_137 : i32
      %c3_i32_138 = arith.constant 3 : i32
      %190 = arith.muli %189, %c3_i32_138 : i32
      %c3_i32_139 = arith.constant 3 : i32
      %191 = arith.addi %190, %c3_i32_139 : i32
      %c2_i32_140 = arith.constant 2 : i32
      %192 = arith.addi %191, %c2_i32_140 : i32
      %193 = arith.index_cast %192 : i32 to index
      %194 = memref.load %arg1[%193] : memref<288xf32, #tpu.memory_space<smem>>
      %c4_i32_141 = arith.constant 4 : i32
      %195 = arith.muli %arg5, %c4_i32_141 : i32
      %c2_i32_142 = arith.constant 2 : i32
      %196 = arith.addi %195, %c2_i32_142 : i32
      %c3_i32_143 = arith.constant 3 : i32
      %197 = arith.muli %196, %c3_i32_143 : i32
      %c3_i32_144 = arith.constant 3 : i32
      %198 = arith.muli %197, %c3_i32_144 : i32
      %c6_i32_145 = arith.constant 6 : i32
      %199 = arith.addi %198, %c6_i32_145 : i32
      %c0_i32_146 = arith.constant 0 : i32
      %200 = arith.addi %199, %c0_i32_146 : i32
      %201 = arith.index_cast %200 : i32 to index
      %202 = memref.load %arg1[%201] : memref<288xf32, #tpu.memory_space<smem>>
      %c4_i32_147 = arith.constant 4 : i32
      %203 = arith.muli %arg5, %c4_i32_147 : i32
      %c2_i32_148 = arith.constant 2 : i32
      %204 = arith.addi %203, %c2_i32_148 : i32
      %c3_i32_149 = arith.constant 3 : i32
      %205 = arith.muli %204, %c3_i32_149 : i32
      %c3_i32_150 = arith.constant 3 : i32
      %206 = arith.muli %205, %c3_i32_150 : i32
      %c6_i32_151 = arith.constant 6 : i32
      %207 = arith.addi %206, %c6_i32_151 : i32
      %c1_i32_152 = arith.constant 1 : i32
      %208 = arith.addi %207, %c1_i32_152 : i32
      %209 = arith.index_cast %208 : i32 to index
      %210 = memref.load %arg1[%209] : memref<288xf32, #tpu.memory_space<smem>>
      %c4_i32_153 = arith.constant 4 : i32
      %211 = arith.muli %arg5, %c4_i32_153 : i32
      %c2_i32_154 = arith.constant 2 : i32
      %212 = arith.addi %211, %c2_i32_154 : i32
      %c3_i32_155 = arith.constant 3 : i32
      %213 = arith.muli %212, %c3_i32_155 : i32
      %c3_i32_156 = arith.constant 3 : i32
      %214 = arith.muli %213, %c3_i32_156 : i32
      %c6_i32_157 = arith.constant 6 : i32
      %215 = arith.addi %214, %c6_i32_157 : i32
      %c2_i32_158 = arith.constant 2 : i32
      %216 = arith.addi %215, %c2_i32_158 : i32
      %217 = arith.index_cast %216 : i32 to index
      %218 = memref.load %arg1[%217] : memref<288xf32, #tpu.memory_space<smem>>
      %c4_i32_159 = arith.constant 4 : i32
      %219 = arith.muli %arg5, %c4_i32_159 : i32
      %c3_i32_160 = arith.constant 3 : i32
      %220 = arith.addi %219, %c3_i32_160 : i32
      %c3_i32_161 = arith.constant 3 : i32
      %221 = arith.muli %220, %c3_i32_161 : i32
      %c3_i32_162 = arith.constant 3 : i32
      %222 = arith.muli %221, %c3_i32_162 : i32
      %c0_i32_163 = arith.constant 0 : i32
      %223 = arith.addi %222, %c0_i32_163 : i32
      %c0_i32_164 = arith.constant 0 : i32
      %224 = arith.addi %223, %c0_i32_164 : i32
      %225 = arith.index_cast %224 : i32 to index
      %226 = memref.load %arg1[%225] : memref<288xf32, #tpu.memory_space<smem>>
      %c4_i32_165 = arith.constant 4 : i32
      %227 = arith.muli %arg5, %c4_i32_165 : i32
      %c3_i32_166 = arith.constant 3 : i32
      %228 = arith.addi %227, %c3_i32_166 : i32
      %c3_i32_167 = arith.constant 3 : i32
      %229 = arith.muli %228, %c3_i32_167 : i32
      %c3_i32_168 = arith.constant 3 : i32
      %230 = arith.muli %229, %c3_i32_168 : i32
      %c0_i32_169 = arith.constant 0 : i32
      %231 = arith.addi %230, %c0_i32_169 : i32
      %c1_i32_170 = arith.constant 1 : i32
      %232 = arith.addi %231, %c1_i32_170 : i32
      %233 = arith.index_cast %232 : i32 to index
      %234 = memref.load %arg1[%233] : memref<288xf32, #tpu.memory_space<smem>>
      %c4_i32_171 = arith.constant 4 : i32
      %235 = arith.muli %arg5, %c4_i32_171 : i32
      %c3_i32_172 = arith.constant 3 : i32
      %236 = arith.addi %235, %c3_i32_172 : i32
      %c3_i32_173 = arith.constant 3 : i32
      %237 = arith.muli %236, %c3_i32_173 : i32
      %c3_i32_174 = arith.constant 3 : i32
      %238 = arith.muli %237, %c3_i32_174 : i32
      %c0_i32_175 = arith.constant 0 : i32
      %239 = arith.addi %238, %c0_i32_175 : i32
      %c2_i32_176 = arith.constant 2 : i32
      %240 = arith.addi %239, %c2_i32_176 : i32
      %241 = arith.index_cast %240 : i32 to index
      %242 = memref.load %arg1[%241] : memref<288xf32, #tpu.memory_space<smem>>
      %c4_i32_177 = arith.constant 4 : i32
      %243 = arith.muli %arg5, %c4_i32_177 : i32
      %c3_i32_178 = arith.constant 3 : i32
      %244 = arith.addi %243, %c3_i32_178 : i32
      %c3_i32_179 = arith.constant 3 : i32
      %245 = arith.muli %244, %c3_i32_179 : i32
      %c3_i32_180 = arith.constant 3 : i32
      %246 = arith.muli %245, %c3_i32_180 : i32
      %c3_i32_181 = arith.constant 3 : i32
      %247 = arith.addi %246, %c3_i32_181 : i32
      %c0_i32_182 = arith.constant 0 : i32
      %248 = arith.addi %247, %c0_i32_182 : i32
      %249 = arith.index_cast %248 : i32 to index
      %250 = memref.load %arg1[%249] : memref<288xf32, #tpu.memory_space<smem>>
      %c4_i32_183 = arith.constant 4 : i32
      %251 = arith.muli %arg5, %c4_i32_183 : i32
      %c3_i32_184 = arith.constant 3 : i32
      %252 = arith.addi %251, %c3_i32_184 : i32
      %c3_i32_185 = arith.constant 3 : i32
      %253 = arith.muli %252, %c3_i32_185 : i32
      %c3_i32_186 = arith.constant 3 : i32
      %254 = arith.muli %253, %c3_i32_186 : i32
      %c3_i32_187 = arith.constant 3 : i32
      %255 = arith.addi %254, %c3_i32_187 : i32
      %c1_i32_188 = arith.constant 1 : i32
      %256 = arith.addi %255, %c1_i32_188 : i32
      %257 = arith.index_cast %256 : i32 to index
      %258 = memref.load %arg1[%257] : memref<288xf32, #tpu.memory_space<smem>>
      %c4_i32_189 = arith.constant 4 : i32
      %259 = arith.muli %arg5, %c4_i32_189 : i32
      %c3_i32_190 = arith.constant 3 : i32
      %260 = arith.addi %259, %c3_i32_190 : i32
      %c3_i32_191 = arith.constant 3 : i32
      %261 = arith.muli %260, %c3_i32_191 : i32
      %c3_i32_192 = arith.constant 3 : i32
      %262 = arith.muli %261, %c3_i32_192 : i32
      %c3_i32_193 = arith.constant 3 : i32
      %263 = arith.addi %262, %c3_i32_193 : i32
      %c2_i32_194 = arith.constant 2 : i32
      %264 = arith.addi %263, %c2_i32_194 : i32
      %265 = arith.index_cast %264 : i32 to index
      %266 = memref.load %arg1[%265] : memref<288xf32, #tpu.memory_space<smem>>
      %c4_i32_195 = arith.constant 4 : i32
      %267 = arith.muli %arg5, %c4_i32_195 : i32
      %c3_i32_196 = arith.constant 3 : i32
      %268 = arith.addi %267, %c3_i32_196 : i32
      %c3_i32_197 = arith.constant 3 : i32
      %269 = arith.muli %268, %c3_i32_197 : i32
      %c3_i32_198 = arith.constant 3 : i32
      %270 = arith.muli %269, %c3_i32_198 : i32
      %c6_i32_199 = arith.constant 6 : i32
      %271 = arith.addi %270, %c6_i32_199 : i32
      %c0_i32_200 = arith.constant 0 : i32
      %272 = arith.addi %271, %c0_i32_200 : i32
      %273 = arith.index_cast %272 : i32 to index
      %274 = memref.load %arg1[%273] : memref<288xf32, #tpu.memory_space<smem>>
      %c4_i32_201 = arith.constant 4 : i32
      %275 = arith.muli %arg5, %c4_i32_201 : i32
      %c3_i32_202 = arith.constant 3 : i32
      %276 = arith.addi %275, %c3_i32_202 : i32
      %c3_i32_203 = arith.constant 3 : i32
      %277 = arith.muli %276, %c3_i32_203 : i32
      %c3_i32_204 = arith.constant 3 : i32
      %278 = arith.muli %277, %c3_i32_204 : i32
      %c6_i32_205 = arith.constant 6 : i32
      %279 = arith.addi %278, %c6_i32_205 : i32
      %c1_i32_206 = arith.constant 1 : i32
      %280 = arith.addi %279, %c1_i32_206 : i32
      %281 = arith.index_cast %280 : i32 to index
      %282 = memref.load %arg1[%281] : memref<288xf32, #tpu.memory_space<smem>>
      %c4_i32_207 = arith.constant 4 : i32
      %283 = arith.muli %arg5, %c4_i32_207 : i32
      %c3_i32_208 = arith.constant 3 : i32
      %284 = arith.addi %283, %c3_i32_208 : i32
      %c3_i32_209 = arith.constant 3 : i32
      %285 = arith.muli %284, %c3_i32_209 : i32
      %c3_i32_210 = arith.constant 3 : i32
      %286 = arith.muli %285, %c3_i32_210 : i32
      %c6_i32_211 = arith.constant 6 : i32
      %287 = arith.addi %286, %c6_i32_211 : i32
      %c2_i32_212 = arith.constant 2 : i32
      %288 = arith.addi %287, %c2_i32_212 : i32
      %289 = arith.index_cast %288 : i32 to index
      %290 = memref.load %arg1[%289] : memref<288xf32, #tpu.memory_space<smem>>
      %c0_i32_213 = arith.constant 0 : i32
      %c14_i32 = arith.constant 14 : i32
      %291 = arith.addi %c0_i32_213, %c14_i32 : i32
      %c1_i32_214 = arith.constant 1 : i32
      scf.for %arg6 = %c0_i32_213 to %291 step %c1_i32_214  : i32 {
        %cst = arith.constant 0.000000e+00 : f32
        %292 = vector.broadcast %cst : f32 to vector<14x1x128xf32>
        %c0_i32_216 = arith.constant 0 : i32
        %293 = arith.addi %arg6, %c0_i32_216 : i32
        %c0 = arith.constant 0 : index
        %294 = arith.index_cast %293 : i32 to index
        %c0_217 = arith.constant 0 : index
        %c0_218 = arith.constant 0 : index
        %c0_219 = arith.constant 0 : index
        %295 = vector.load %arg3[%c0, %294, %c0_217, %c0_218, %c0_219] : memref<4x16x16x1x128xf32, #tpu.memory_space<vmem>>, vector<1x1x16x1x128xf32>
        %296 = vector.shape_cast %295 : vector<1x1x16x1x128xf32> to vector<16x1x128xf32>
        %297 = vector.extract_strided_slice %296 {offsets = [0, 0, 0], sizes = [14, 1, 128], strides = [1, 1, 1]} : vector<16x1x128xf32> to vector<14x1x128xf32>
        %298 = vector.broadcast %10 : f32 to vector<14x1x128xf32>
        %299 = arith.mulf %298, %297 : vector<14x1x128xf32>
        %300 = arith.addf %292, %299 : vector<14x1x128xf32>
        %301 = vector.extract_strided_slice %296 {offsets = [1, 0, 0], sizes = [14, 1, 128], strides = [1, 1, 1]} : vector<16x1x128xf32> to vector<14x1x128xf32>
        %302 = vector.broadcast %18 : f32 to vector<14x1x128xf32>
        %303 = arith.mulf %302, %301 : vector<14x1x128xf32>
        %304 = arith.addf %300, %303 : vector<14x1x128xf32>
        %305 = vector.extract_strided_slice %296 {offsets = [2, 0, 0], sizes = [14, 1, 128], strides = [1, 1, 1]} : vector<16x1x128xf32> to vector<14x1x128xf32>
        %306 = vector.broadcast %26 : f32 to vector<14x1x128xf32>
        %307 = arith.mulf %306, %305 : vector<14x1x128xf32>
        %308 = arith.addf %304, %307 : vector<14x1x128xf32>
        %c1_i32_220 = arith.constant 1 : i32
        %309 = arith.addi %arg6, %c1_i32_220 : i32
        %c0_221 = arith.constant 0 : index
        %310 = arith.index_cast %309 : i32 to index
        %c0_222 = arith.constant 0 : index
        %c0_223 = arith.constant 0 : index
        %c0_224 = arith.constant 0 : index
        %311 = vector.load %arg3[%c0_221, %310, %c0_222, %c0_223, %c0_224] : memref<4x16x16x1x128xf32, #tpu.memory_space<vmem>>, vector<1x1x16x1x128xf32>
        %312 = vector.shape_cast %311 : vector<1x1x16x1x128xf32> to vector<16x1x128xf32>
        %313 = vector.extract_strided_slice %312 {offsets = [0, 0, 0], sizes = [14, 1, 128], strides = [1, 1, 1]} : vector<16x1x128xf32> to vector<14x1x128xf32>
        %314 = vector.broadcast %34 : f32 to vector<14x1x128xf32>
        %315 = arith.mulf %314, %313 : vector<14x1x128xf32>
        %316 = arith.addf %308, %315 : vector<14x1x128xf32>
        %317 = vector.extract_strided_slice %312 {offsets = [1, 0, 0], sizes = [14, 1, 128], strides = [1, 1, 1]} : vector<16x1x128xf32> to vector<14x1x128xf32>
        %318 = vector.broadcast %42 : f32 to vector<14x1x128xf32>
        %319 = arith.mulf %318, %317 : vector<14x1x128xf32>
        %320 = arith.addf %316, %319 : vector<14x1x128xf32>
        %321 = vector.extract_strided_slice %312 {offsets = [2, 0, 0], sizes = [14, 1, 128], strides = [1, 1, 1]} : vector<16x1x128xf32> to vector<14x1x128xf32>
        %322 = vector.broadcast %50 : f32 to vector<14x1x128xf32>
        %323 = arith.mulf %322, %321 : vector<14x1x128xf32>
        %324 = arith.addf %320, %323 : vector<14x1x128xf32>
        %c2_i32_225 = arith.constant 2 : i32
        %325 = arith.addi %arg6, %c2_i32_225 : i32
        %c0_226 = arith.constant 0 : index
        %326 = arith.index_cast %325 : i32 to index
        %c0_227 = arith.constant 0 : index
        %c0_228 = arith.constant 0 : index
        %c0_229 = arith.constant 0 : index
        %327 = vector.load %arg3[%c0_226, %326, %c0_227, %c0_228, %c0_229] : memref<4x16x16x1x128xf32, #tpu.memory_space<vmem>>, vector<1x1x16x1x128xf32>
        %328 = vector.shape_cast %327 : vector<1x1x16x1x128xf32> to vector<16x1x128xf32>
        %329 = vector.extract_strided_slice %328 {offsets = [0, 0, 0], sizes = [14, 1, 128], strides = [1, 1, 1]} : vector<16x1x128xf32> to vector<14x1x128xf32>
        %330 = vector.broadcast %58 : f32 to vector<14x1x128xf32>
        %331 = arith.mulf %330, %329 : vector<14x1x128xf32>
        %332 = arith.addf %324, %331 : vector<14x1x128xf32>
        %333 = vector.extract_strided_slice %328 {offsets = [1, 0, 0], sizes = [14, 1, 128], strides = [1, 1, 1]} : vector<16x1x128xf32> to vector<14x1x128xf32>
        %334 = vector.broadcast %66 : f32 to vector<14x1x128xf32>
        %335 = arith.mulf %334, %333 : vector<14x1x128xf32>
        %336 = arith.addf %332, %335 : vector<14x1x128xf32>
        %337 = vector.extract_strided_slice %328 {offsets = [2, 0, 0], sizes = [14, 1, 128], strides = [1, 1, 1]} : vector<16x1x128xf32> to vector<14x1x128xf32>
        %338 = vector.broadcast %74 : f32 to vector<14x1x128xf32>
        %339 = arith.mulf %338, %337 : vector<14x1x128xf32>
        %340 = arith.addf %336, %339 : vector<14x1x128xf32>
        %c0_i32_230 = arith.constant 0 : i32
        %341 = arith.addi %arg6, %c0_i32_230 : i32
        %c1 = arith.constant 1 : index
        %342 = arith.index_cast %341 : i32 to index
        %c0_231 = arith.constant 0 : index
        %c0_232 = arith.constant 0 : index
        %c0_233 = arith.constant 0 : index
        %343 = vector.load %arg3[%c1, %342, %c0_231, %c0_232, %c0_233] : memref<4x16x16x1x128xf32, #tpu.memory_space<vmem>>, vector<1x1x16x1x128xf32>
        %344 = vector.shape_cast %343 : vector<1x1x16x1x128xf32> to vector<16x1x128xf32>
        %345 = vector.extract_strided_slice %344 {offsets = [0, 0, 0], sizes = [14, 1, 128], strides = [1, 1, 1]} : vector<16x1x128xf32> to vector<14x1x128xf32>
        %346 = vector.broadcast %82 : f32 to vector<14x1x128xf32>
        %347 = arith.mulf %346, %345 : vector<14x1x128xf32>
        %348 = arith.addf %340, %347 : vector<14x1x128xf32>
        %349 = vector.extract_strided_slice %344 {offsets = [1, 0, 0], sizes = [14, 1, 128], strides = [1, 1, 1]} : vector<16x1x128xf32> to vector<14x1x128xf32>
        %350 = vector.broadcast %90 : f32 to vector<14x1x128xf32>
        %351 = arith.mulf %350, %349 : vector<14x1x128xf32>
        %352 = arith.addf %348, %351 : vector<14x1x128xf32>
        %353 = vector.extract_strided_slice %344 {offsets = [2, 0, 0], sizes = [14, 1, 128], strides = [1, 1, 1]} : vector<16x1x128xf32> to vector<14x1x128xf32>
        %354 = vector.broadcast %98 : f32 to vector<14x1x128xf32>
        %355 = arith.mulf %354, %353 : vector<14x1x128xf32>
        %356 = arith.addf %352, %355 : vector<14x1x128xf32>
        %c1_i32_234 = arith.constant 1 : i32
        %357 = arith.addi %arg6, %c1_i32_234 : i32
        %c1_235 = arith.constant 1 : index
        %358 = arith.index_cast %357 : i32 to index
        %c0_236 = arith.constant 0 : index
        %c0_237 = arith.constant 0 : index
        %c0_238 = arith.constant 0 : index
        %359 = vector.load %arg3[%c1_235, %358, %c0_236, %c0_237, %c0_238] : memref<4x16x16x1x128xf32, #tpu.memory_space<vmem>>, vector<1x1x16x1x128xf32>
        %360 = vector.shape_cast %359 : vector<1x1x16x1x128xf32> to vector<16x1x128xf32>
        %361 = vector.extract_strided_slice %360 {offsets = [0, 0, 0], sizes = [14, 1, 128], strides = [1, 1, 1]} : vector<16x1x128xf32> to vector<14x1x128xf32>
        %362 = vector.broadcast %106 : f32 to vector<14x1x128xf32>
        %363 = arith.mulf %362, %361 : vector<14x1x128xf32>
        %364 = arith.addf %356, %363 : vector<14x1x128xf32>
        %365 = vector.extract_strided_slice %360 {offsets = [1, 0, 0], sizes = [14, 1, 128], strides = [1, 1, 1]} : vector<16x1x128xf32> to vector<14x1x128xf32>
        %366 = vector.broadcast %114 : f32 to vector<14x1x128xf32>
        %367 = arith.mulf %366, %365 : vector<14x1x128xf32>
        %368 = arith.addf %364, %367 : vector<14x1x128xf32>
        %369 = vector.extract_strided_slice %360 {offsets = [2, 0, 0], sizes = [14, 1, 128], strides = [1, 1, 1]} : vector<16x1x128xf32> to vector<14x1x128xf32>
        %370 = vector.broadcast %122 : f32 to vector<14x1x128xf32>
        %371 = arith.mulf %370, %369 : vector<14x1x128xf32>
        %372 = arith.addf %368, %371 : vector<14x1x128xf32>
        %c2_i32_239 = arith.constant 2 : i32
        %373 = arith.addi %arg6, %c2_i32_239 : i32
        %c1_240 = arith.constant 1 : index
        %374 = arith.index_cast %373 : i32 to index
        %c0_241 = arith.constant 0 : index
        %c0_242 = arith.constant 0 : index
        %c0_243 = arith.constant 0 : index
        %375 = vector.load %arg3[%c1_240, %374, %c0_241, %c0_242, %c0_243] : memref<4x16x16x1x128xf32, #tpu.memory_space<vmem>>, vector<1x1x16x1x128xf32>
        %376 = vector.shape_cast %375 : vector<1x1x16x1x128xf32> to vector<16x1x128xf32>
        %377 = vector.extract_strided_slice %376 {offsets = [0, 0, 0], sizes = [14, 1, 128], strides = [1, 1, 1]} : vector<16x1x128xf32> to vector<14x1x128xf32>
        %378 = vector.broadcast %130 : f32 to vector<14x1x128xf32>
        %379 = arith.mulf %378, %377 : vector<14x1x128xf32>
        %380 = arith.addf %372, %379 : vector<14x1x128xf32>
        %381 = vector.extract_strided_slice %376 {offsets = [1, 0, 0], sizes = [14, 1, 128], strides = [1, 1, 1]} : vector<16x1x128xf32> to vector<14x1x128xf32>
        %382 = vector.broadcast %138 : f32 to vector<14x1x128xf32>
        %383 = arith.mulf %382, %381 : vector<14x1x128xf32>
        %384 = arith.addf %380, %383 : vector<14x1x128xf32>
        %385 = vector.extract_strided_slice %376 {offsets = [2, 0, 0], sizes = [14, 1, 128], strides = [1, 1, 1]} : vector<16x1x128xf32> to vector<14x1x128xf32>
        %386 = vector.broadcast %146 : f32 to vector<14x1x128xf32>
        %387 = arith.mulf %386, %385 : vector<14x1x128xf32>
        %388 = arith.addf %384, %387 : vector<14x1x128xf32>
        %c0_i32_244 = arith.constant 0 : i32
        %389 = arith.addi %arg6, %c0_i32_244 : i32
        %c2 = arith.constant 2 : index
        %390 = arith.index_cast %389 : i32 to index
        %c0_245 = arith.constant 0 : index
        %c0_246 = arith.constant 0 : index
        %c0_247 = arith.constant 0 : index
        %391 = vector.load %arg3[%c2, %390, %c0_245, %c0_246, %c0_247] : memref<4x16x16x1x128xf32, #tpu.memory_space<vmem>>, vector<1x1x16x1x128xf32>
        %392 = vector.shape_cast %391 : vector<1x1x16x1x128xf32> to vector<16x1x128xf32>
        %393 = vector.extract_strided_slice %392 {offsets = [0, 0, 0], sizes = [14, 1, 128], strides = [1, 1, 1]} : vector<16x1x128xf32> to vector<14x1x128xf32>
        %394 = vector.broadcast %154 : f32 to vector<14x1x128xf32>
        %395 = arith.mulf %394, %393 : vector<14x1x128xf32>
        %396 = arith.addf %388, %395 : vector<14x1x128xf32>
        %397 = vector.extract_strided_slice %392 {offsets = [1, 0, 0], sizes = [14, 1, 128], strides = [1, 1, 1]} : vector<16x1x128xf32> to vector<14x1x128xf32>
        %398 = vector.broadcast %162 : f32 to vector<14x1x128xf32>
        %399 = arith.mulf %398, %397 : vector<14x1x128xf32>
        %400 = arith.addf %396, %399 : vector<14x1x128xf32>
        %401 = vector.extract_strided_slice %392 {offsets = [2, 0, 0], sizes = [14, 1, 128], strides = [1, 1, 1]} : vector<16x1x128xf32> to vector<14x1x128xf32>
        %402 = vector.broadcast %170 : f32 to vector<14x1x128xf32>
        %403 = arith.mulf %402, %401 : vector<14x1x128xf32>
        %404 = arith.addf %400, %403 : vector<14x1x128xf32>
        %c1_i32_248 = arith.constant 1 : i32
        %405 = arith.addi %arg6, %c1_i32_248 : i32
        %c2_249 = arith.constant 2 : index
        %406 = arith.index_cast %405 : i32 to index
        %c0_250 = arith.constant 0 : index
        %c0_251 = arith.constant 0 : index
        %c0_252 = arith.constant 0 : index
        %407 = vector.load %arg3[%c2_249, %406, %c0_250, %c0_251, %c0_252] : memref<4x16x16x1x128xf32, #tpu.memory_space<vmem>>, vector<1x1x16x1x128xf32>
        %408 = vector.shape_cast %407 : vector<1x1x16x1x128xf32> to vector<16x1x128xf32>
        %409 = vector.extract_strided_slice %408 {offsets = [0, 0, 0], sizes = [14, 1, 128], strides = [1, 1, 1]} : vector<16x1x128xf32> to vector<14x1x128xf32>
        %410 = vector.broadcast %178 : f32 to vector<14x1x128xf32>
        %411 = arith.mulf %410, %409 : vector<14x1x128xf32>
        %412 = arith.addf %404, %411 : vector<14x1x128xf32>
        %413 = vector.extract_strided_slice %408 {offsets = [1, 0, 0], sizes = [14, 1, 128], strides = [1, 1, 1]} : vector<16x1x128xf32> to vector<14x1x128xf32>
        %414 = vector.broadcast %186 : f32 to vector<14x1x128xf32>
        %415 = arith.mulf %414, %413 : vector<14x1x128xf32>
        %416 = arith.addf %412, %415 : vector<14x1x128xf32>
        %417 = vector.extract_strided_slice %408 {offsets = [2, 0, 0], sizes = [14, 1, 128], strides = [1, 1, 1]} : vector<16x1x128xf32> to vector<14x1x128xf32>
        %418 = vector.broadcast %194 : f32 to vector<14x1x128xf32>
        %419 = arith.mulf %418, %417 : vector<14x1x128xf32>
        %420 = arith.addf %416, %419 : vector<14x1x128xf32>
        %c2_i32_253 = arith.constant 2 : i32
        %421 = arith.addi %arg6, %c2_i32_253 : i32
        %c2_254 = arith.constant 2 : index
        %422 = arith.index_cast %421 : i32 to index
        %c0_255 = arith.constant 0 : index
        %c0_256 = arith.constant 0 : index
        %c0_257 = arith.constant 0 : index
        %423 = vector.load %arg3[%c2_254, %422, %c0_255, %c0_256, %c0_257] : memref<4x16x16x1x128xf32, #tpu.memory_space<vmem>>, vector<1x1x16x1x128xf32>
        %424 = vector.shape_cast %423 : vector<1x1x16x1x128xf32> to vector<16x1x128xf32>
        %425 = vector.extract_strided_slice %424 {offsets = [0, 0, 0], sizes = [14, 1, 128], strides = [1, 1, 1]} : vector<16x1x128xf32> to vector<14x1x128xf32>
        %426 = vector.broadcast %202 : f32 to vector<14x1x128xf32>
        %427 = arith.mulf %426, %425 : vector<14x1x128xf32>
        %428 = arith.addf %420, %427 : vector<14x1x128xf32>
        %429 = vector.extract_strided_slice %424 {offsets = [1, 0, 0], sizes = [14, 1, 128], strides = [1, 1, 1]} : vector<16x1x128xf32> to vector<14x1x128xf32>
        %430 = vector.broadcast %210 : f32 to vector<14x1x128xf32>
        %431 = arith.mulf %430, %429 : vector<14x1x128xf32>
        %432 = arith.addf %428, %431 : vector<14x1x128xf32>
        %433 = vector.extract_strided_slice %424 {offsets = [2, 0, 0], sizes = [14, 1, 128], strides = [1, 1, 1]} : vector<16x1x128xf32> to vector<14x1x128xf32>
        %434 = vector.broadcast %218 : f32 to vector<14x1x128xf32>
        %435 = arith.mulf %434, %433 : vector<14x1x128xf32>
        %436 = arith.addf %432, %435 : vector<14x1x128xf32>
        %c0_i32_258 = arith.constant 0 : i32
        %437 = arith.addi %arg6, %c0_i32_258 : i32
        %c3 = arith.constant 3 : index
        %438 = arith.index_cast %437 : i32 to index
        %c0_259 = arith.constant 0 : index
        %c0_260 = arith.constant 0 : index
        %c0_261 = arith.constant 0 : index
        %439 = vector.load %arg3[%c3, %438, %c0_259, %c0_260, %c0_261] : memref<4x16x16x1x128xf32, #tpu.memory_space<vmem>>, vector<1x1x16x1x128xf32>
        %440 = vector.shape_cast %439 : vector<1x1x16x1x128xf32> to vector<16x1x128xf32>
        %441 = vector.extract_strided_slice %440 {offsets = [0, 0, 0], sizes = [14, 1, 128], strides = [1, 1, 1]} : vector<16x1x128xf32> to vector<14x1x128xf32>
        %442 = vector.broadcast %226 : f32 to vector<14x1x128xf32>
        %443 = arith.mulf %442, %441 : vector<14x1x128xf32>
        %444 = arith.addf %436, %443 : vector<14x1x128xf32>
        %445 = vector.extract_strided_slice %440 {offsets = [1, 0, 0], sizes = [14, 1, 128], strides = [1, 1, 1]} : vector<16x1x128xf32> to vector<14x1x128xf32>
        %446 = vector.broadcast %234 : f32 to vector<14x1x128xf32>
        %447 = arith.mulf %446, %445 : vector<14x1x128xf32>
        %448 = arith.addf %444, %447 : vector<14x1x128xf32>
        %449 = vector.extract_strided_slice %440 {offsets = [2, 0, 0], sizes = [14, 1, 128], strides = [1, 1, 1]} : vector<16x1x128xf32> to vector<14x1x128xf32>
        %450 = vector.broadcast %242 : f32 to vector<14x1x128xf32>
        %451 = arith.mulf %450, %449 : vector<14x1x128xf32>
        %452 = arith.addf %448, %451 : vector<14x1x128xf32>
        %c1_i32_262 = arith.constant 1 : i32
        %453 = arith.addi %arg6, %c1_i32_262 : i32
        %c3_263 = arith.constant 3 : index
        %454 = arith.index_cast %453 : i32 to index
        %c0_264 = arith.constant 0 : index
        %c0_265 = arith.constant 0 : index
        %c0_266 = arith.constant 0 : index
        %455 = vector.load %arg3[%c3_263, %454, %c0_264, %c0_265, %c0_266] : memref<4x16x16x1x128xf32, #tpu.memory_space<vmem>>, vector<1x1x16x1x128xf32>
        %456 = vector.shape_cast %455 : vector<1x1x16x1x128xf32> to vector<16x1x128xf32>
        %457 = vector.extract_strided_slice %456 {offsets = [0, 0, 0], sizes = [14, 1, 128], strides = [1, 1, 1]} : vector<16x1x128xf32> to vector<14x1x128xf32>
        %458 = vector.broadcast %250 : f32 to vector<14x1x128xf32>
        %459 = arith.mulf %458, %457 : vector<14x1x128xf32>
        %460 = arith.addf %452, %459 : vector<14x1x128xf32>
        %461 = vector.extract_strided_slice %456 {offsets = [1, 0, 0], sizes = [14, 1, 128], strides = [1, 1, 1]} : vector<16x1x128xf32> to vector<14x1x128xf32>
        %462 = vector.broadcast %258 : f32 to vector<14x1x128xf32>
        %463 = arith.mulf %462, %461 : vector<14x1x128xf32>
        %464 = arith.addf %460, %463 : vector<14x1x128xf32>
        %465 = vector.extract_strided_slice %456 {offsets = [2, 0, 0], sizes = [14, 1, 128], strides = [1, 1, 1]} : vector<16x1x128xf32> to vector<14x1x128xf32>
        %466 = vector.broadcast %266 : f32 to vector<14x1x128xf32>
        %467 = arith.mulf %466, %465 : vector<14x1x128xf32>
        %468 = arith.addf %464, %467 : vector<14x1x128xf32>
        %c2_i32_267 = arith.constant 2 : i32
        %469 = arith.addi %arg6, %c2_i32_267 : i32
        %c3_268 = arith.constant 3 : index
        %470 = arith.index_cast %469 : i32 to index
        %c0_269 = arith.constant 0 : index
        %c0_270 = arith.constant 0 : index
        %c0_271 = arith.constant 0 : index
        %471 = vector.load %arg3[%c3_268, %470, %c0_269, %c0_270, %c0_271] : memref<4x16x16x1x128xf32, #tpu.memory_space<vmem>>, vector<1x1x16x1x128xf32>
        %472 = vector.shape_cast %471 : vector<1x1x16x1x128xf32> to vector<16x1x128xf32>
        %473 = vector.extract_strided_slice %472 {offsets = [0, 0, 0], sizes = [14, 1, 128], strides = [1, 1, 1]} : vector<16x1x128xf32> to vector<14x1x128xf32>
        %474 = vector.broadcast %274 : f32 to vector<14x1x128xf32>
        %475 = arith.mulf %474, %473 : vector<14x1x128xf32>
        %476 = arith.addf %468, %475 : vector<14x1x128xf32>
        %477 = vector.extract_strided_slice %472 {offsets = [1, 0, 0], sizes = [14, 1, 128], strides = [1, 1, 1]} : vector<16x1x128xf32> to vector<14x1x128xf32>
        %478 = vector.broadcast %282 : f32 to vector<14x1x128xf32>
        %479 = arith.mulf %478, %477 : vector<14x1x128xf32>
        %480 = arith.addf %476, %479 : vector<14x1x128xf32>
        %481 = vector.extract_strided_slice %472 {offsets = [2, 0, 0], sizes = [14, 1, 128], strides = [1, 1, 1]} : vector<16x1x128xf32> to vector<14x1x128xf32>
        %482 = vector.broadcast %290 : f32 to vector<14x1x128xf32>
        %483 = arith.mulf %482, %481 : vector<14x1x128xf32>
        %484 = arith.addf %480, %483 : vector<14x1x128xf32>
        %485 = vector.broadcast %2 : f32 to vector<14x1x128xf32>
        %486 = arith.addf %484, %485 : vector<14x1x128xf32>
        %cst_272 = arith.constant 0.000000e+00 : f32
        %487 = vector.broadcast %cst_272 : f32 to vector<14x1x128xf32>
        %488 = arith.maximumf %486, %487 : vector<14x1x128xf32>
        %489 = arith.index_cast %arg5 : i32 to index
        %490 = arith.index_cast %arg6 : i32 to index
        %c0_273 = arith.constant 0 : index
        %c0_274 = arith.constant 0 : index
        %c0_275 = arith.constant 0 : index
        %491 = vector.load %arg4[%489, %490, %c0_273, %c0_274, %c0_275] : memref<8x14x14x1x128xf32, #tpu.memory_space<vmem>>, vector<1x1x14x1x128xf32>
        %492 = vector.shape_cast %491 : vector<1x1x14x1x128xf32> to vector<14x1x128xf32>
        %493 = vector.shape_cast %488 : vector<14x1x128xf32> to vector<1x1x14x1x128xf32>
        tpu.vector_store %arg4[%489, %490, %c0_273, %c0_274, %c0_275], %493 {strides = array<i32>} : memref<8x14x14x1x128xf32, #tpu.memory_space<vmem>>, vector<1x1x14x1x128xf32>,
      }
      %c14_i32_215 = arith.constant 14 : i32
    }
    %c8_i32_0 = arith.constant 8 : i32
    return
  }
  func.func @transform_0(%arg0: i32) -> i32 {
    %c0_i32 = arith.constant 0 : i32
    %c0_i32_0 = arith.constant 0 : i32
    return %c0_i32 : i32
  }
  func.func @transform_1(%arg0: i32) -> i32 {
    %c0_i32 = arith.constant 0 : i32
    %c0_i32_0 = arith.constant 0 : i32
    return %c0_i32 : i32
  }
  func.func @transform_2(%arg0: i32) -> (i32, i32, i32, i32, i32) {
    %c0_i32 = arith.constant 0 : i32
    %c0_i32_0 = arith.constant 0 : i32
    %c0_i32_1 = arith.constant 0 : i32
    %c0_i32_2 = arith.constant 0 : i32
    %c0_i32_3 = arith.constant 0 : i32
    return %c0_i32, %c0_i32_0, %c0_i32_1, %arg0, %c0_i32_2 : i32, i32, i32, i32, i32
  }
  func.func @transform_3(%arg0: i32) -> (i32, i32, i32, i32, i32) {
    %c0_i32 = arith.constant 0 : i32
    %c0_i32_0 = arith.constant 0 : i32
    %c0_i32_1 = arith.constant 0 : i32
    %c0_i32_2 = arith.constant 0 : i32
    %c0_i32_3 = arith.constant 0 : i32
    return %c0_i32, %c0_i32_0, %c0_i32_1, %arg0, %c0_i32_2 : i32, i32, i32, i32, i32
  }
}

</mosaic_0001>

<llo_original>
// kernel: tpu_custom_call.1
$region0: #{tpu_custom_call.1}
  #allocation0 [shape = 'u32[]', space=smem, size = 0x4, offset = 0x4, fixed_abs, tag = 'smem constant byte address 0x4 - core index']
  #allocation1 [shape = 'u32[72,128]{1,0:T(1,128)}', space=vmem, size = 0x9000, scoped, tag = 'internal scratch']
  %s0 = inlined_call_operand.hbm [shape: f32[288], index: 0, kind: input, shape index: {}]
  %s1 = inlined_call_operand.hbm [shape: f32[8], index: 1, kind: input, shape index: {}]
  %s2 = inlined_call_operand.hbm [shape: f32[4,16,16,1,128], index: 2, kind: input, shape index: {}]
  %s3 = inlined_call_operand.hbm [shape: f32[8,14,14,1,128], index: 3, kind: output, shape index: {}]
  %s4 = sld [smem:[#allocation0]]
  $region48: #{tpu_custom_call.1} parent=0
    _
  %s6 = ssub.s32 1, %s4
  %s7 = scalar_select 0, %s6, %s4
  $region1: #{tpu_custom_call.1} parent=0
    #allocation2 [shape = 'u8[1536]{0}', space=smem, size = 0x600, scoped, tag = 'input window, operand 0, single buffered']
    #allocation3 [shape = 's32[1]{0}', space=sflag, size = 0x4, scoped, tag = 'scoped memory for tpu_custom_call.1']
    #allocation4 [shape = 's32[1]{0}', space=sflag, size = 0x4, scoped, tag = 'scoped memory for tpu_custom_call.1']
    #allocation5 [shape = 's32[1]{0}', space=sflag, size = 0x4, scoped, tag = 'scoped memory for tpu_custom_call.1']
    #allocation6 [shape = 'u8[512]{0}', space=smem, size = 0x200, scoped, tag = 'input window, operand 1, single buffered']
    #allocation7 [shape = 's32[1]{0}', space=sflag, size = 0x4, scoped, tag = 'scoped memory for tpu_custom_call.1']
    #allocation8 [shape = 'u8[524288]{0}', space=vmem, size = 0x80000, scoped, tag = 'input window, operand 2, single buffered']
    #allocation9 [shape = 'u8[802816]{0}', space=vmem, size = 0xc4000, scoped, tag = 'output window, operand 0, single buffered']
    %8 = vsyncpa [#allocation5], 0
    %9 = vsyncpa [#allocation7], 0
    %10 = vsyncpa [#allocation3], 0
    %11 = vsyncpa [#allocation4], 0
    // Predicated region
    $region2: #{tpu_custom_call.1} parent=1 // pred_check
      _
    $region3: #{tpu_custom_call.1} parent=1 // pred_check_branch
      %13 = sbr.rel (0) target = $region5
    $region4: #{tpu_custom_call.1} parent=1 // pred_region
      %15 = vsyncadd [#allocation5], 0
      %s17 = sshll.u32 %s0, 4
      %s18 = int_to_ptr.hbm [resolvable:$true] %s17
      %20 = dma.hbm_to_smem %s18, 48, [#allocation2], [#allocation5]
    $region5: #{tpu_custom_call.1} parent=1 // pred_fallthru
      _
    // Predicated region
    $region6: #{tpu_custom_call.1} parent=1 // pred_check
      _
    $region7: #{tpu_custom_call.1} parent=1 // pred_check_branch
      %22 = sbr.rel (0) target = $region9
    $region8: #{tpu_custom_call.1} parent=1 // pred_region
      %24 = vsyncadd [#allocation7], 0
      %s26 = sshll.u32 %s1, 4
      %s27 = int_to_ptr.hbm [resolvable:$true] %s26
      %29 = dma.hbm_to_smem %s27, 16, [#allocation6], [#allocation7]
    $region9: #{tpu_custom_call.1} parent=1 // pred_fallthru
      _
    // Predicated region
    $region10: #{tpu_custom_call.1} parent=1 // pred_check
      _
    $region11: #{tpu_custom_call.1} parent=1 // pred_check_branch
      %31 = sbr.rel (0) target = $region13
    $region12: #{tpu_custom_call.1} parent=1 // pred_region
      %33 = vsyncadd [#allocation3], 0
      %s34 = sshll.u32 %s2, 4
      %s35 = int_to_ptr.hbm [resolvable:$true] %s34
      %s36 = sshll.u32 [#allocation8], 4
      %s37 = int_to_ptr.vmem [resolvable:$true] %s36
      %42 = dma.hbm_to_vmem [thread:$0]  %s35, 16384, %s37, [#allocation3], 16, 16, 1
    $region13: #{tpu_custom_call.1} parent=1 // pred_fallthru
      _
    // Predicated region
    $region14: #{tpu_custom_call.1} parent=1 // pred_check
      _
    $region15: #{tpu_custom_call.1} parent=1 // pred_check_branch
      %44 = sbr.rel (0) target = $region17
    $region16: #{tpu_custom_call.1} parent=1 // pred_region
      %46 = dma.done [#allocation5], 48
    $region17: #{tpu_custom_call.1} parent=1 // pred_fallthru
      _
    // Predicated region
    $region18: #{tpu_custom_call.1} parent=1 // pred_check
      _
    $region19: #{tpu_custom_call.1} parent=1 // pred_check_branch
      %48 = sbr.rel (0) target = $region21
    $region20: #{tpu_custom_call.1} parent=1 // pred_region
      %50 = dma.done [#allocation7], 16
    $region21: #{tpu_custom_call.1} parent=1 // pred_fallthru
      _
    // Predicated region
    $region22: #{tpu_custom_call.1} parent=1 // pred_check
      _
    $region23: #{tpu_custom_call.1} parent=1 // pred_check_branch
      %52 = sbr.rel (0) target = $region25
    $region24: #{tpu_custom_call.1} parent=1 // pred_region
      %54 = dma.done [#allocation3], 16384
    $region25: #{tpu_custom_call.1} parent=1 // pred_fallthru
      _
    %55 = sfence
    loop: start=0, step=1, limit=8
    $region26: #{tpu_custom_call.1} parent=1 // loop_pre_header
      _
    $region27: #{tpu_custom_call.1} parent=1 // loop_header
      %s57 = sphi 0, %s61
      %p58 = scmp.ge.s32.totalorder %s57, 8
    $region28: #{tpu_custom_call.1} parent=1 // loop_header_branch
      %60 = sbr.rel (%p58) target = $region32
    $region29: #{tpu_custom_call.1} parent=1 // loop_body
      %s62 = sld [smem:[#allocation6 + %s57]]
      %s63 = smul.u32 %s57, 36
      %s64 = sld [smem:[#allocation2 + %s63]]
      %s65 = sadd.s32 %s63, 1
      %s66 = sld [smem:[#allocation2 + %s65]]
      %s67 = sadd.s32 %s63, 2
      %s68 = sld [smem:[#allocation2 + %s67]]
      %s69 = sadd.s32 %s63, 3
      %s70 = sld [smem:[#allocation2 + %s69]]
      %s71 = sadd.s32 %s63, 4
      %s72 = sld [smem:[#allocation2 + %s71]]
      %s73 = sadd.s32 %s63, 5
      %s74 = sld [smem:[#allocation2 + %s73]]
      %s75 = sadd.s32 %s63, 6
      %s76 = sld [smem:[#allocation2 + %s75]]
      %s77 = sadd.s32 %s63, 7
      %s78 = sld [smem:[#allocation2 + %s77]]
      %s79 = sadd.s32 %s63, 8
      %s80 = sld [smem:[#allocation2 + %s79]]
      %s81 = smul.u32 %s57, 4
      %s82 = sadd.s32 %s81, 1
      %s83 = smul.u32 %s82, 9
      %s84 = sld [smem:[#allocation2 + %s83]]
      %s85 = sadd.s32 %s83, 1
      %s86 = sld [smem:[#allocation2 + %s85]]
      %s87 = sadd.s32 %s83, 2
      %s88 = sld [smem:[#allocation2 + %s87]]
      %s89 = sadd.s32 %s83, 3
      %s90 = sld [smem:[#allocation2 + %s89]]
      %s91 = sadd.s32 %s83, 4
      %s92 = sld [smem:[#allocation2 + %s91]]
      %s93 = sadd.s32 %s83, 5
      %s94 = sld [smem:[#allocation2 + %s93]]
      %s95 = sadd.s32 %s83, 6
      %s96 = sld [smem:[#allocation2 + %s95]]
      %s97 = sadd.s32 %s83, 7
      %s98 = sld [smem:[#allocation2 + %s97]]
      %s99 = sadd.s32 %s83, 8
      %s100 = sld [smem:[#allocation2 + %s99]]
      %s101 = sadd.s32 %s81, 2
      %s102 = smul.u32 %s101, 9
      %s103 = sld [smem:[#allocation2 + %s102]]
      %s104 = sadd.s32 %s102, 1
      %s105 = sld [smem:[#allocation2 + %s104]]
      %s106 = sadd.s32 %s102, 2
      %s107 = sld [smem:[#allocation2 + %s106]]
      %s108 = sadd.s32 %s102, 3
      %s109 = sld [smem:[#allocation2 + %s108]]
      %s110 = sadd.s32 %s102, 4
      %s111 = sld [smem:[#allocation2 + %s110]]
      %s112 = sadd.s32 %s102, 5
      %s113 = sld [smem:[#allocation2 + %s112]]
      %s114 = sadd.s32 %s102, 6
      %s115 = sld [smem:[#allocation2 + %s114]]
      %s116 = sadd.s32 %s102, 7
      %s117 = sld [smem:[#allocation2 + %s116]]
      %s118 = sadd.s32 %s102, 8
      %s119 = sld [smem:[#allocation2 + %s118]]
      %s120 = sadd.s32 %s81, 3
      %s121 = smul.u32 %s120, 9
      %s122 = sld [smem:[#allocation2 + %s121]]
      %s123 = sadd.s32 %s121, 1
      %s124 = sld [smem:[#allocation2 + %s123]]
      %s125 = sadd.s32 %s121, 2
      %s126 = sld [smem:[#allocation2 + %s125]]
      %s127 = sadd.s32 %s121, 3
      %s128 = sld [smem:[#allocation2 + %s127]]
      %s129 = sadd.s32 %s121, 4
      %s130 = sld [smem:[#allocation2 + %s129]]
      %s131 = sadd.s32 %s121, 5
      %s132 = sld [smem:[#allocation2 + %s131]]
      %s133 = sadd.s32 %s121, 6
      %s134 = sld [smem:[#allocation2 + %s133]]
      %s135 = sadd.s32 %s121, 7
      %s136 = sld [smem:[#allocation2 + %s135]]
      %s137 = sadd.s32 %s121, 8
      %s138 = sld [smem:[#allocation2 + %s137]]
      loop: start=0, step=1, limit=14
      $region33: #{tpu_custom_call.1} parent=29 // loop_pre_header
        _
      $region34: #{tpu_custom_call.1} parent=29 // loop_header
        %s140 = sphi 0, %s144
        %p141 = scmp.ge.s32.totalorder %s140, 14
      $region35: #{tpu_custom_call.1} parent=29 // loop_header_branch
        %143 = sbr.rel (%p141) target = $region39
      $region36: #{tpu_custom_call.1} parent=29 // loop_body
        %s145 = smul.u32 %s140, 16
        %s146 = scalar_lea.vmem [#allocation8], %s145
        %v147 = vld [vmem:[%s146] sm:$0x1]
        %v148 = vld [vmem:[%s146 + $0x1] sm:$0x1]
        %v149 = vld [vmem:[%s146 + $0x2] sm:$0x1]
        %v150 = vld [vmem:[%s146 + $0x3] sm:$0x1]
        %v151 = vld [vmem:[%s146 + $0x4] sm:$0x1]
        %v152 = vld [vmem:[%s146 + $0x5] sm:$0x1]
        %v153 = vld [vmem:[%s146 + $0x6] sm:$0x1]
        %v154 = vld [vmem:[%s146 + $0x7] sm:$0x1]
        %v155 = vld [vmem:[%s146 + $0x8] sm:$0x1]
        %v156 = vld [vmem:[%s146 + $0x9] sm:$0x1]
        %v157 = vld [vmem:[%s146 + $0xa] sm:$0x1]
        %v158 = vld [vmem:[%s146 + $0xb] sm:$0x1]
        %v159 = vld [vmem:[%s146 + $0xc] sm:$0x1]
        %v160 = vld [vmem:[%s146 + $0xd] sm:$0x1]
        %v161 = vld [vmem:[%s146 + $0xe] sm:$0x1]
        %v162 = vld [vmem:[%s146 + $0xf] sm:$0x1]
        %v163 = vstv %s64
        %v164 = vmul.f32 %v163, %v147
        %v165 = vmul.f32 %v163, %v148
        %v166 = vmul.f32 %v163, %v149
        %v167 = vmul.f32 %v163, %v150
        %v168 = vmul.f32 %v163, %v151
        %v169 = vmul.f32 %v163, %v152
        %v170 = vmul.f32 %v163, %v153
        %v171 = vmul.f32 %v163, %v154
        %v172 = vmul.f32 %v163, %v155
        %v173 = vmul.f32 %v163, %v156
        %v174 = vmul.f32 %v163, %v157
        %v175 = vmul.f32 %v163, %v158
        %v176 = vmul.f32 %v163, %v159
        %v177 = vmul.f32 %v163, %v160
        %v178 = vadd.f32 %v164, 0.0
        %v179 = vadd.f32 %v165, 0.0
        %v180 = vadd.f32 %v166, 0.0
        %v181 = vadd.f32 %v167, 0.0
        %v182 = vadd.f32 %v168, 0.0
        %v183 = vadd.f32 %v169, 0.0
        %v184 = vadd.f32 %v170, 0.0
        %v185 = vadd.f32 %v171, 0.0
        %v186 = vadd.f32 %v172, 0.0
        %v187 = vadd.f32 %v173, 0.0
        %v188 = vadd.f32 %v174, 0.0
        %v189 = vadd.f32 %v175, 0.0
        %v190 = vadd.f32 %v176, 0.0
        %v191 = vadd.f32 %v177, 0.0
        %v192 = vstv %s66
        %v193 = vmul.f32 %v192, %v148
        %v194 = vmul.f32 %v192, %v149
        %v195 = vmul.f32 %v192, %v150
        %v196 = vmul.f32 %v192, %v151
        %v197 = vmul.f32 %v192, %v152
        %v198 = vmul.f32 %v192, %v153
        %v199 = vmul.f32 %v192, %v154
        %v200 = vmul.f32 %v192, %v155
        %v201 = vmul.f32 %v192, %v156
        %v202 = vmul.f32 %v192, %v157
        %v203 = vmul.f32 %v192, %v158
        %v204 = vmul.f32 %v192, %v159
        %v205 = vmul.f32 %v192, %v160
        %v206 = vmul.f32 %v192, %v161
        %v207 = vadd.f32 %v178, %v193
        %v208 = vadd.f32 %v179, %v194
        %v209 = vadd.f32 %v180, %v195
        %v210 = vadd.f32 %v181, %v196
        %v211 = vadd.f32 %v182, %v197
        %v212 = vadd.f32 %v183, %v198
        %v213 = vadd.f32 %v184, %v199
        %v214 = vadd.f32 %v185, %v200
        %v215 = vadd.f32 %v186, %v201
        %v216 = vadd.f32 %v187, %v202
        %v217 = vadd.f32 %v188, %v203
        %v218 = vadd.f32 %v189, %v204
        %v219 = vadd.f32 %v190, %v205
        %v220 = vadd.f32 %v191, %v206
        %v221 = vstv %s68
        %v222 = vmul.f32 %v221, %v149
        %v223 = vmul.f32 %v221, %v150
        %v224 = vmul.f32 %v221, %v151
        %v225 = vmul.f32 %v221, %v152
        %v226 = vmul.f32 %v221, %v153
        %v227 = vmul.f32 %v221, %v154
        %v228 = vmul.f32 %v221, %v155
        %v229 = vmul.f32 %v221, %v156
        %v230 = vmul.f32 %v221, %v157
        %v231 = vmul.f32 %v221, %v158
        %v232 = vmul.f32 %v221, %v159
        %v233 = vmul.f32 %v221, %v160
        %v234 = vmul.f32 %v221, %v161
        %v235 = vmul.f32 %v221, %v162
        %v236 = vadd.f32 %v207, %v222
        %v237 = vadd.f32 %v208, %v223
        %v238 = vadd.f32 %v209, %v224
        %v239 = vadd.f32 %v210, %v225
        %v240 = vadd.f32 %v211, %v226
        %v241 = vadd.f32 %v212, %v227
        %v242 = vadd.f32 %v213, %v228
        %v243 = vadd.f32 %v214, %v229
        %v244 = vadd.f32 %v215, %v230
        %v245 = vadd.f32 %v216, %v231
        %v246 = vadd.f32 %v217, %v232
        %v247 = vadd.f32 %v218, %v233
        %v248 = vadd.f32 %v219, %v234
        %v249 = vadd.f32 %v220, %v235
        %s250 = sadd.s32 %s140, 1
        %s251 = smul.u32 %s250, 16
        %s252 = scalar_lea.vmem [#allocation8], %s251
        %v253 = vld [vmem:[%s252] sm:$0x1]
        %v254 = vld [vmem:[%s252 + $0x1] sm:$0x1]
        %v255 = vld [vmem:[%s252 + $0x2] sm:$0x1]
        %v256 = vld [vmem:[%s252 + $0x3] sm:$0x1]
        %v257 = vld [vmem:[%s252 + $0x4] sm:$0x1]
        %v258 = vld [vmem:[%s252 + $0x5] sm:$0x1]
        %v259 = vld [vmem:[%s252 + $0x6] sm:$0x1]
        %v260 = vld [vmem:[%s252 + $0x7] sm:$0x1]
        %v261 = vld [vmem:[%s252 + $0x8] sm:$0x1]
        %v262 = vld [vmem:[%s252 + $0x9] sm:$0x1]
        %v263 = vld [vmem:[%s252 + $0xa] sm:$0x1]
        %v264 = vld [vmem:[%s252 + $0xb] sm:$0x1]
        %v265 = vld [vmem:[%s252 + $0xc] sm:$0x1]
        %v266 = vld [vmem:[%s252 + $0xd] sm:$0x1]
        %v267 = vld [vmem:[%s252 + $0xe] sm:$0x1]
        %v268 = vld [vmem:[%s252 + $0xf] sm:$0x1]
        %v269 = vstv %s70
        %v270 = vmul.f32 %v269, %v253
        %v271 = vmul.f32 %v269, %v254
        %v272 = vmul.f32 %v269, %v255
        %v273 = vmul.f32 %v269, %v256
        %v274 = vmul.f32 %v269, %v257
        %v275 = vmul.f32 %v269, %v258
        %v276 = vmul.f32 %v269, %v259
        %v277 = vmul.f32 %v269, %v260
        %v278 = vmul.f32 %v269, %v261
        %v279 = vmul.f32 %v269, %v262
        %v280 = vmul.f32 %v269, %v263
        %v281 = vmul.f32 %v269, %v264
        %v282 = vmul.f32 %v269, %v265
        %v283 = vmul.f32 %v269, %v266
        %v284 = vadd.f32 %v236, %v270
        %v285 = vadd.f32 %v237, %v271
        %v286 = vadd.f32 %v238, %v272
        %v287 = vadd.f32 %v239, %v273
        %v288 = vadd.f32 %v240, %v274
        %v289 = vadd.f32 %v241, %v275
        %v290 = vadd.f32 %v242, %v276
        %v291 = vadd.f32 %v243, %v277
        %v292 = vadd.f32 %v244, %v278
        %v293 = vadd.f32 %v245, %v279
        %v294 = vadd.f32 %v246, %v280
        %v295 = vadd.f32 %v247, %v281
        %v296 = vadd.f32 %v248, %v282
        %v297 = vadd.f32 %v249, %v283
        %v298 = vstv %s72
        %v299 = vmul.f32 %v298, %v254
        %v300 = vmul.f32 %v298, %v255
        %v301 = vmul.f32 %v298, %v256
        %v302 = vmul.f32 %v298, %v257
        %v303 = vmul.f32 %v298, %v258
        %v304 = vmul.f32 %v298, %v259
        %v305 = vmul.f32 %v298, %v260
        %v306 = vmul.f32 %v298, %v261
        %v307 = vmul.f32 %v298, %v262
        %v308 = vmul.f32 %v298, %v263
        %v309 = vmul.f32 %v298, %v264
        %v310 = vmul.f32 %v298, %v265
        %v311 = vmul.f32 %v298, %v266
        %v312 = vmul.f32 %v298, %v267
        %v313 = vadd.f32 %v284, %v299
        %v314 = vadd.f32 %v285, %v300
        %v315 = vadd.f32 %v286, %v301
        %v316 = vadd.f32 %v287, %v302
        %v317 = vadd.f32 %v288, %v303
        %v318 = vadd.f32 %v289, %v304
        %v319 = vadd.f32 %v290, %v305
        %v320 = vadd.f32 %v291, %v306
        %v321 = vadd.f32 %v292, %v307
        %v322 = vadd.f32 %v293, %v308
        %v323 = vadd.f32 %v294, %v309
        %v324 = vadd.f32 %v295, %v310
        %v325 = vadd.f32 %v296, %v311
        %v326 = vadd.f32 %v297, %v312
        %v327 = vstv %s74
        %v328 = vmul.f32 %v327, %v255
        %v329 = vmul.f32 %v327, %v256
        %v330 = vmul.f32 %v327, %v257
        %v331 = vmul.f32 %v327, %v258
        %v332 = vmul.f32 %v327, %v259
        %v333 = vmul.f32 %v327, %v260
        %v334 = vmul.f32 %v327, %v261
        %v335 = vmul.f32 %v327, %v262
        %v336 = vmul.f32 %v327, %v263
        %v337 = vmul.f32 %v327, %v264
        %v338 = vmul.f32 %v327, %v265
        %v339 = vmul.f32 %v327, %v266
        %v340 = vmul.f32 %v327, %v267
        %v341 = vmul.f32 %v327, %v268
        %v342 = vadd.f32 %v313, %v328
        %v343 = vadd.f32 %v314, %v329
        %v344 = vadd.f32 %v315, %v330
        %v345 = vadd.f32 %v316, %v331
        %v346 = vadd.f32 %v317, %v332
        %v347 = vadd.f32 %v318, %v333
        %v348 = vadd.f32 %v319, %v334
        %v349 = vadd.f32 %v320, %v335
        %v350 = vadd.f32 %v321, %v336
        %v351 = vadd.f32 %v322, %v337
        %v352 = vadd.f32 %v323, %v338
        %v353 = vadd.f32 %v324, %v339
        %v354 = vadd.f32 %v325, %v340
        %v355 = vadd.f32 %v326, %v341
        %s356 = sadd.s32 %s140, 2
        %s357 = smul.u32 %s356, 16
        %s358 = scalar_lea.vmem [#allocation8], %s357
        %v359 = vld [vmem:[%s358] sm:$0x1]
        %v360 = vld [vmem:[%s358 + $0x1] sm:$0x1]
        %v361 = vld [vmem:[%s358 + $0x2] sm:$0x1]
        %v362 = vld [vmem:[%s358 + $0x3] sm:$0x1]
        %v363 = vld [vmem:[%s358 + $0x4] sm:$0x1]
        %v364 = vld [vmem:[%s358 + $0x5] sm:$0x1]
        %v365 = vld [vmem:[%s358 + $0x6] sm:$0x1]
        %v366 = vld [vmem:[%s358 + $0x7] sm:$0x1]
        %v367 = vld [vmem:[%s358 + $0x8] sm:$0x1]
        %v368 = vld [vmem:[%s358 + $0x9] sm:$0x1]
        %v369 = vld [vmem:[%s358 + $0xa] sm:$0x1]
        %v370 = vld [vmem:[%s358 + $0xb] sm:$0x1]
        %v371 = vld [vmem:[%s358 + $0xc] sm:$0x1]
        %v372 = vld [vmem:[%s358 + $0xd] sm:$0x1]
        %v373 = vld [vmem:[%s358 + $0xe] sm:$0x1]
        %v374 = vld [vmem:[%s358 + $0xf] sm:$0x1]
        %v375 = vstv %s76
        %v376 = vmul.f32 %v375, %v359
        %v377 = vmul.f32 %v375, %v360
        %v378 = vmul.f32 %v375, %v361
        %v379 = vmul.f32 %v375, %v362
        %v380 = vmul.f32 %v375, %v363
        %v381 = vmul.f32 %v375, %v364
        %v382 = vmul.f32 %v375, %v365
        %v383 = vmul.f32 %v375, %v366
        %v384 = vmul.f32 %v375, %v367
        %v385 = vmul.f32 %v375, %v368
        %v386 = vmul.f32 %v375, %v369
        %v387 = vmul.f32 %v375, %v370
        %v388 = vmul.f32 %v375, %v371
        %v389 = vmul.f32 %v375, %v372
        %v390 = vadd.f32 %v342, %v376
        %v391 = vadd.f32 %v343, %v377
        %v392 = vadd.f32 %v344, %v378
        %v393 = vadd.f32 %v345, %v379
        %v394 = vadd.f32 %v346, %v380
        %v395 = vadd.f32 %v347, %v381
        %v396 = vadd.f32 %v348, %v382
        %v397 = vadd.f32 %v349, %v383
        %v398 = vadd.f32 %v350, %v384
        %v399 = vadd.f32 %v351, %v385
        %v400 = vadd.f32 %v352, %v386
        %v401 = vadd.f32 %v353, %v387
        %v402 = vadd.f32 %v354, %v388
        %v403 = vadd.f32 %v355, %v389
        %v404 = vstv %s78
        %v405 = vmul.f32 %v404, %v360
        %v406 = vmul.f32 %v404, %v361
        %v407 = vmul.f32 %v404, %v362
        %v408 = vmul.f32 %v404, %v363
        %v409 = vmul.f32 %v404, %v364
        %v410 = vmul.f32 %v404, %v365
        %v411 = vmul.f32 %v404, %v366
        %v412 = vmul.f32 %v404, %v367
        %v413 = vmul.f32 %v404, %v368
        %v414 = vmul.f32 %v404, %v369
        %v415 = vmul.f32 %v404, %v370
        %v416 = vmul.f32 %v404, %v371
        %v417 = vmul.f32 %v404, %v372
        %v418 = vmul.f32 %v404, %v373
        %v419 = vadd.f32 %v390, %v405
        %v420 = vadd.f32 %v391, %v406
        %v421 = vadd.f32 %v392, %v407
        %v422 = vadd.f32 %v393, %v408
        %v423 = vadd.f32 %v394, %v409
        %v424 = vadd.f32 %v395, %v410
        %v425 = vadd.f32 %v396, %v411
        %v426 = vadd.f32 %v397, %v412
        %v427 = vadd.f32 %v398, %v413
        %v428 = vadd.f32 %v399, %v414
        %v429 = vadd.f32 %v400, %v415
        %v430 = vadd.f32 %v401, %v416
        %v431 = vadd.f32 %v402, %v417
        %v432 = vadd.f32 %v403, %v418
        %v433 = vstv %s80
        %v434 = vmul.f32 %v433, %v361
        %v435 = vmul.f32 %v433, %v362
        %v436 = vmul.f32 %v433, %v363
        %v437 = vmul.f32 %v433, %v364
        %v438 = vmul.f32 %v433, %v365
        %v439 = vmul.f32 %v433, %v366
        %v440 = vmul.f32 %v433, %v367
        %v441 = vmul.f32 %v433, %v368
        %v442 = vmul.f32 %v433, %v369
        %v443 = vmul.f32 %v433, %v370
        %v444 = vmul.f32 %v433, %v371
        %v445 = vmul.f32 %v433, %v372
        %v446 = vmul.f32 %v433, %v373
        %v447 = vmul.f32 %v433, %v374
        %v448 = vadd.f32 %v419, %v434
        %v449 = vadd.f32 %v420, %v435
        %v450 = vadd.f32 %v421, %v436
        %v451 = vadd.f32 %v422, %v437
        %v452 = vadd.f32 %v423, %v438
        %v453 = vadd.f32 %v424, %v439
        %v454 = vadd.f32 %v425, %v440
        %v455 = vadd.f32 %v426, %v441
        %v456 = vadd.f32 %v427, %v442
        %v457 = vadd.f32 %v428, %v443
        %v458 = vadd.f32 %v429, %v444
        %v459 = vadd.f32 %v430, %v445
        %v460 = vadd.f32 %v431, %v446
        %v461 = vadd.f32 %v432, %v447
        %s462 = sadd.s32 %s145, 256
        %s463 = scalar_lea.vmem [#allocation8], %s462
        %v464 = vld [vmem:[%s463] sm:$0x1]
        %v465 = vld [vmem:[%s463 + $0x1] sm:$0x1]
        %v466 = vld [vmem:[%s463 + $0x2] sm:$0x1]
        %v467 = vld [vmem:[%s463 + $0x3] sm:$0x1]
        %v468 = vld [vmem:[%s463 + $0x4] sm:$0x1]
        %v469 = vld [vmem:[%s463 + $0x5] sm:$0x1]
        %v470 = vld [vmem:[%s463 + $0x6] sm:$0x1]
        %v471 = vld [vmem:[%s463 + $0x7] sm:$0x1]
        %v472 = vld [vmem:[%s463 + $0x8] sm:$0x1]
        %v473 = vld [vmem:[%s463 + $0x9] sm:$0x1]
        %v474 = vld [vmem:[%s463 + $0xa] sm:$0x1]
        %v475 = vld [vmem:[%s463 + $0xb] sm:$0x1]
        %v476 = vld [vmem:[%s463 + $0xc] sm:$0x1]
        %v477 = vld [vmem:[%s463 + $0xd] sm:$0x1]
        %v478 = vld [vmem:[%s463 + $0xe] sm:$0x1]
        %v479 = vld [vmem:[%s463 + $0xf] sm:$0x1]
        %v480 = vstv %s84
        %v481 = vmul.f32 %v480, %v464
        %v482 = vmul.f32 %v480, %v465
        %v483 = vmul.f32 %v480, %v466
        %v484 = vmul.f32 %v480, %v467
        %v485 = vmul.f32 %v480, %v468
        %v486 = vmul.f32 %v480, %v469
        %v487 = vmul.f32 %v480, %v470
        %v488 = vmul.f32 %v480, %v471
        %v489 = vmul.f32 %v480, %v472
        %v490 = vmul.f32 %v480, %v473
        %v491 = vmul.f32 %v480, %v474
        %v492 = vmul.f32 %v480, %v475
        %v493 = vmul.f32 %v480, %v476
        %v494 = vmul.f32 %v480, %v477
        %v495 = vadd.f32 %v448, %v481
        %v496 = vadd.f32 %v449, %v482
        %v497 = vadd.f32 %v450, %v483
        %v498 = vadd.f32 %v451, %v484
        %v499 = vadd.f32 %v452, %v485
        %v500 = vadd.f32 %v453, %v486
        %v501 = vadd.f32 %v454, %v487
        %v502 = vadd.f32 %v455, %v488
        %v503 = vadd.f32 %v456, %v489
        %v504 = vadd.f32 %v457, %v490
        %v505 = vadd.f32 %v458, %v491
        %v506 = vadd.f32 %v459, %v492
        %v507 = vadd.f32 %v460, %v493
        %v508 = vadd.f32 %v461, %v494
        %v509 = vstv %s86
        %v510 = vmul.f32 %v509, %v465
        %v511 = vmul.f32 %v509, %v466
        %v512 = vmul.f32 %v509, %v467
        %v513 = vmul.f32 %v509, %v468
        %v514 = vmul.f32 %v509, %v469
        %v515 = vmul.f32 %v509, %v470
        %v516 = vmul.f32 %v509, %v471
        %v517 = vmul.f32 %v509, %v472
        %v518 = vmul.f32 %v509, %v473
        %v519 = vmul.f32 %v509, %v474
        %v520 = vmul.f32 %v509, %v475
        %v521 = vmul.f32 %v509, %v476
        %v522 = vmul.f32 %v509, %v477
        %v523 = vmul.f32 %v509, %v478
        %v524 = vadd.f32 %v495, %v510
        %v525 = vadd.f32 %v496, %v511
        %v526 = vadd.f32 %v497, %v512
        %v527 = vadd.f32 %v498, %v513
        %v528 = vadd.f32 %v499, %v514
        %v529 = vadd.f32 %v500, %v515
        %v530 = vadd.f32 %v501, %v516
        %v531 = vadd.f32 %v502, %v517
        %v532 = vadd.f32 %v503, %v518
        %v533 = vadd.f32 %v504, %v519
        %v534 = vadd.f32 %v505, %v520
        %v535 = vadd.f32 %v506, %v521
        %v536 = vadd.f32 %v507, %v522
        %v537 = vadd.f32 %v508, %v523
        %v538 = vstv %s88
        %v539 = vmul.f32 %v538, %v466
        %v540 = vmul.f32 %v538, %v467
        %v541 = vmul.f32 %v538, %v468
        %v542 = vmul.f32 %v538, %v469
        %v543 = vmul.f32 %v538, %v470
        %v544 = vmul.f32 %v538, %v471
        %v545 = vmul.f32 %v538, %v472
        %v546 = vmul.f32 %v538, %v473
        %v547 = vmul.f32 %v538, %v474
        %v548 = vmul.f32 %v538, %v475
        %v549 = vmul.f32 %v538, %v476
        %v550 = vmul.f32 %v538, %v477
        %v551 = vmul.f32 %v538, %v478
        %v552 = vmul.f32 %v538, %v479
        %v553 = vadd.f32 %v524, %v539
        %v554 = vadd.f32 %v525, %v540
        %v555 = vadd.f32 %v526, %v541
        %v556 = vadd.f32 %v527, %v542
        %v557 = vadd.f32 %v528, %v543
        %v558 = vadd.f32 %v529, %v544
        %v559 = vadd.f32 %v530, %v545
        %v560 = vadd.f32 %v531, %v546
        %v561 = vadd.f32 %v532, %v547
        %v562 = vadd.f32 %v533, %v548
        %v563 = vadd.f32 %v534, %v549
        %v564 = vadd.f32 %v535, %v550
        %v565 = vadd.f32 %v536, %v551
        %v566 = vadd.f32 %v537, %v552
        %s567 = sadd.s32 %s251, 256
        %s568 = scalar_lea.vmem [#allocation8], %s567
        %v569 = vld [vmem:[%s568] sm:$0x1]
        %v570 = vld [vmem:[%s568 + $0x1] sm:$0x1]
        %v571 = vld [vmem:[%s568 + $0x2] sm:$0x1]
        %v572 = vld [vmem:[%s568 + $0x3] sm:$0x1]
        %v573 = vld [vmem:[%s568 + $0x4] sm:$0x1]
        %v574 = vld [vmem:[%s568 + $0x5] sm:$0x1]
        %v575 = vld [vmem:[%s568 + $0x6] sm:$0x1]
        %v576 = vld [vmem:[%s568 + $0x7] sm:$0x1]
        %v577 = vld [vmem:[%s568 + $0x8] sm:$0x1]
        %v578 = vld [vmem:[%s568 + $0x9] sm:$0x1]
        %v579 = vld [vmem:[%s568 + $0xa] sm:$0x1]
        %v580 = vld [vmem:[%s568 + $0xb] sm:$0x1]
        %v581 = vld [vmem:[%s568 + $0xc] sm:$0x1]
        %v582 = vld [vmem:[%s568 + $0xd] sm:$0x1]
        %v583 = vld [vmem:[%s568 + $0xe] sm:$0x1]
        %v584 = vld [vmem:[%s568 + $0xf] sm:$0x1]
        %v585 = vstv %s90
        %v586 = vmul.f32 %v585, %v569
        %v587 = vmul.f32 %v585, %v570
        %v588 = vmul.f32 %v585, %v571
        %v589 = vmul.f32 %v585, %v572
        %v590 = vmul.f32 %v585, %v573
        %v591 = vmul.f32 %v585, %v574
        %v592 = vmul.f32 %v585, %v575
        %v593 = vmul.f32 %v585, %v576
        %v594 = vmul.f32 %v585, %v577
        %v595 = vmul.f32 %v585, %v578
        %v596 = vmul.f32 %v585, %v579
        %v597 = vmul.f32 %v585, %v580
        %v598 = vmul.f32 %v585, %v581
        %v599 = vmul.f32 %v585, %v582
        %v600 = vadd.f32 %v553, %v586
        %v601 = vadd.f32 %v554, %v587
        %v602 = vadd.f32 %v555, %v588
        %v603 = vadd.f32 %v556, %v589
        %v604 = vadd.f32 %v557, %v590
        %v605 = vadd.f32 %v558, %v591
        %v606 = vadd.f32 %v559, %v592
        %v607 = vadd.f32 %v560, %v593
        %v608 = vadd.f32 %v561, %v594
        %v609 = vadd.f32 %v562, %v595
        %v610 = vadd.f32 %v563, %v596
        %v611 = vadd.f32 %v564, %v597
        %v612 = vadd.f32 %v565, %v598
        %v613 = vadd.f32 %v566, %v599
        %v614 = vstv %s92
        %v615 = vmul.f32 %v614, %v570
        %v616 = vmul.f32 %v614, %v571
        %v617 = vmul.f32 %v614, %v572
        %v618 = vmul.f32 %v614, %v573
        %v619 = vmul.f32 %v614, %v574
        %v620 = vmul.f32 %v614, %v575
        %v621 = vmul.f32 %v614, %v576
        %v622 = vmul.f32 %v614, %v577
        %v623 = vmul.f32 %v614, %v578
        %v624 = vmul.f32 %v614, %v579
        %v625 = vmul.f32 %v614, %v580
        %v626 = vmul.f32 %v614, %v581
        %v627 = vmul.f32 %v614, %v582
        %v628 = vmul.f32 %v614, %v583
        %v629 = vadd.f32 %v600, %v615
        %v630 = vadd.f32 %v601, %v616
        %v631 = vadd.f32 %v602, %v617
        %v632 = vadd.f32 %v603, %v618
        %v633 = vadd.f32 %v604, %v619
        %v634 = vadd.f32 %v605, %v620
        %v635 = vadd.f32 %v606, %v621
        %v636 = vadd.f32 %v607, %v622
        %v637 = vadd.f32 %v608, %v623
        %v638 = vadd.f32 %v609, %v624
        %v639 = vadd.f32 %v610, %v625
        %v640 = vadd.f32 %v611, %v626
        %v641 = vadd.f32 %v612, %v627
        %v642 = vadd.f32 %v613, %v628
        %v643 = vstv %s94
        %v644 = vmul.f32 %v643, %v571
        %v645 = vmul.f32 %v643, %v572
        %v646 = vmul.f32 %v643, %v573
        %v647 = vmul.f32 %v643, %v574
        %v648 = vmul.f32 %v643, %v575
        %v649 = vmul.f32 %v643, %v576
        %v650 = vmul.f32 %v643, %v577
        %v651 = vmul.f32 %v643, %v578
        %v652 = vmul.f32 %v643, %v579
        %v653 = vmul.f32 %v643, %v580
        %v654 = vmul.f32 %v643, %v581
        %v655 = vmul.f32 %v643, %v582
        %v656 = vmul.f32 %v643, %v583
        %v657 = vmul.f32 %v643, %v584
        %v658 = vadd.f32 %v629, %v644
        %v659 = vadd.f32 %v630, %v645
        %v660 = vadd.f32 %v631, %v646
        %v661 = vadd.f32 %v632, %v647
        %v662 = vadd.f32 %v633, %v648
        %v663 = vadd.f32 %v634, %v649
        %v664 = vadd.f32 %v635, %v650
        %v665 = vadd.f32 %v636, %v651
        %v666 = vadd.f32 %v637, %v652
        %v667 = vadd.f32 %v638, %v653
        %v668 = vadd.f32 %v639, %v654
        %v669 = vadd.f32 %v640, %v655
        %v670 = vadd.f32 %v641, %v656
        %v671 = vadd.f32 %v642, %v657
        %s672 = sadd.s32 %s357, 256
        %s673 = scalar_lea.vmem [#allocation8], %s672
        %v674 = vld [vmem:[%s673] sm:$0x1]
        %v675 = vld [vmem:[%s673 + $0x1] sm:$0x1]
        %v676 = vld [vmem:[%s673 + $0x2] sm:$0x1]
        %v677 = vld [vmem:[%s673 + $0x3] sm:$0x1]
        %v678 = vld [vmem:[%s673 + $0x4] sm:$0x1]
        %v679 = vld [vmem:[%s673 + $0x5] sm:$0x1]
        %v680 = vld [vmem:[%s673 + $0x6] sm:$0x1]
        %v681 = vld [vmem:[%s673 + $0x7] sm:$0x1]
        %v682 = vld [vmem:[%s673 + $0x8] sm:$0x1]
        %v683 = vld [vmem:[%s673 + $0x9] sm:$0x1]
        %v684 = vld [vmem:[%s673 + $0xa] sm:$0x1]
        %v685 = vld [vmem:[%s673 + $0xb] sm:$0x1]
        %v686 = vld [vmem:[%s673 + $0xc] sm:$0x1]
        %v687 = vld [vmem:[%s673 + $0xd] sm:$0x1]
        %v688 = vld [vmem:[%s673 + $0xe] sm:$0x1]
        %v689 = vld [vmem:[%s673 + $0xf] sm:$0x1]
        %v690 = vstv %s96
        %v691 = vmul.f32 %v690, %v674
        %v692 = vmul.f32 %v690, %v675
        %v693 = vmul.f32 %v690, %v676
        %v694 = vmul.f32 %v690, %v677
        %v695 = vmul.f32 %v690, %v678
        %v696 = vmul.f32 %v690, %v679
        %v697 = vmul.f32 %v690, %v680
        %v698 = vmul.f32 %v690, %v681
        %v699 = vmul.f32 %v690, %v682
        %v700 = vmul.f32 %v690, %v683
        %v701 = vmul.f32 %v690, %v684
        %v702 = vmul.f32 %v690, %v685
        %v703 = vmul.f32 %v690, %v686
        %v704 = vmul.f32 %v690, %v687
        %v705 = vadd.f32 %v658, %v691
        %v706 = vadd.f32 %v659, %v692
        %v707 = vadd.f32 %v660, %v693
        %v708 = vadd.f32 %v661, %v694
        %v709 = vadd.f32 %v662, %v695
        %v710 = vadd.f32 %v663, %v696
        %v711 = vadd.f32 %v664, %v697
        %v712 = vadd.f32 %v665, %v698
        %v713 = vadd.f32 %v666, %v699
        %v714 = vadd.f32 %v667, %v700
        %v715 = vadd.f32 %v668, %v701
        %v716 = vadd.f32 %v669, %v702
        %v717 = vadd.f32 %v670, %v703
        %v718 = vadd.f32 %v671, %v704
        %v719 = vstv %s98
        %v720 = vmul.f32 %v719, %v675
        %v721 = vmul.f32 %v719, %v676
        %v722 = vmul.f32 %v719, %v677
        %v723 = vmul.f32 %v719, %v678
        %v724 = vmul.f32 %v719, %v679
        %v725 = vmul.f32 %v719, %v680
        %v726 = vmul.f32 %v719, %v681
        %v727 = vmul.f32 %v719, %v682
        %v728 = vmul.f32 %v719, %v683
        %v729 = vmul.f32 %v719, %v684
        %v730 = vmul.f32 %v719, %v685
        %v731 = vmul.f32 %v719, %v686
        %v732 = vmul.f32 %v719, %v687
        %v733 = vmul.f32 %v719, %v688
        %v734 = vadd.f32 %v705, %v720
        %v735 = vadd.f32 %v706, %v721
        %v736 = vadd.f32 %v707, %v722
        %v737 = vadd.f32 %v708, %v723
        %v738 = vadd.f32 %v709, %v724
        %v739 = vadd.f32 %v710, %v725
        %v740 = vadd.f32 %v711, %v726
        %v741 = vadd.f32 %v712, %v727
        %v742 = vadd.f32 %v713, %v728
        %v743 = vadd.f32 %v714, %v729
        %v744 = vadd.f32 %v715, %v730
        %v745 = vadd.f32 %v716, %v731
        %v746 = vadd.f32 %v717, %v732
        %v747 = vadd.f32 %v718, %v733
        %v748 = vstv %s100
        %v749 = vmul.f32 %v748, %v676
        %v750 = vmul.f32 %v748, %v677
        %v751 = vmul.f32 %v748, %v678
        %v752 = vmul.f32 %v748, %v679
        %v753 = vmul.f32 %v748, %v680
        %v754 = vmul.f32 %v748, %v681
        %v755 = vmul.f32 %v748, %v682
        %v756 = vmul.f32 %v748, %v683
        %v757 = vmul.f32 %v748, %v684
        %v758 = vmul.f32 %v748, %v685
        %v759 = vmul.f32 %v748, %v686
        %v760 = vmul.f32 %v748, %v687
        %v761 = vmul.f32 %v748, %v688
        %v762 = vmul.f32 %v748, %v689
        %v763 = vadd.f32 %v734, %v749
        %v764 = vadd.f32 %v735, %v750
        %v765 = vadd.f32 %v736, %v751
        %v766 = vadd.f32 %v737, %v752
        %v767 = vadd.f32 %v738, %v753
        %v768 = vadd.f32 %v739, %v754
        %v769 = vadd.f32 %v740, %v755
        %v770 = vadd.f32 %v741, %v756
        %v771 = vadd.f32 %v742, %v757
        %v772 = vadd.f32 %v743, %v758
        %v773 = vadd.f32 %v744, %v759
        %v774 = vadd.f32 %v745, %v760
        %v775 = vadd.f32 %v746, %v761
        %v776 = vadd.f32 %v747, %v762
        %s777 = sadd.s32 %s145, 512
        %s778 = scalar_lea.vmem [#allocation8], %s777
        %v779 = vld [vmem:[%s778] sm:$0x1]
        %v780 = vld [vmem:[%s778 + $0x1] sm:$0x1]
        %v781 = vld [vmem:[%s778 + $0x2] sm:$0x1]
        %v782 = vld [vmem:[%s778 + $0x3] sm:$0x1]
        %v783 = vld [vmem:[%s778 + $0x4] sm:$0x1]
        %v784 = vld [vmem:[%s778 + $0x5] sm:$0x1]
        %v785 = vld [vmem:[%s778 + $0x6] sm:$0x1]
        %v786 = vld [vmem:[%s778 + $0x7] sm:$0x1]
        %v787 = vld [vmem:[%s778 + $0x8] sm:$0x1]
        %v788 = vld [vmem:[%s778 + $0x9] sm:$0x1]
        %v789 = vld [vmem:[%s778 + $0xa] sm:$0x1]
        %v790 = vld [vmem:[%s778 + $0xb] sm:$0x1]
        %v791 = vld [vmem:[%s778 + $0xc] sm:$0x1]
        %v792 = vld [vmem:[%s778 + $0xd] sm:$0x1]
        %v793 = vld [vmem:[%s778 + $0xe] sm:$0x1]
        %v794 = vld [vmem:[%s778 + $0xf] sm:$0x1]
        %v795 = vstv %s103
        %v796 = vmul.f32 %v795, %v779
        %v797 = vmul.f32 %v795, %v780
        %v798 = vmul.f32 %v795, %v781
        %v799 = vmul.f32 %v795, %v782
        %v800 = vmul.f32 %v795, %v783
        %v801 = vmul.f32 %v795, %v784
        %v802 = vmul.f32 %v795, %v785
        %v803 = vmul.f32 %v795, %v786
        %v804 = vmul.f32 %v795, %v787
        %v805 = vmul.f32 %v795, %v788
        %v806 = vmul.f32 %v795, %v789
        %v807 = vmul.f32 %v795, %v790
        %v808 = vmul.f32 %v795, %v791
        %v809 = vmul.f32 %v795, %v792
        %v810 = vadd.f32 %v763, %v796
        %v811 = vadd.f32 %v764, %v797
        %v812 = vadd.f32 %v765, %v798
        %v813 = vadd.f32 %v766, %v799
        %v814 = vadd.f32 %v767, %v800
        %v815 = vadd.f32 %v768, %v801
        %v816 = vadd.f32 %v769, %v802
        %v817 = vadd.f32 %v770, %v803
        %v818 = vadd.f32 %v771, %v804
        %v819 = vadd.f32 %v772, %v805
        %v820 = vadd.f32 %v773, %v806
        %v821 = vadd.f32 %v774, %v807
        %v822 = vadd.f32 %v775, %v808
        %v823 = vadd.f32 %v776, %v809
        %v824 = vstv %s105
        %v825 = vmul.f32 %v824, %v780
        %v826 = vmul.f32 %v824, %v781
        %v827 = vmul.f32 %v824, %v782
        %v828 = vmul.f32 %v824, %v783
        %v829 = vmul.f32 %v824, %v784
        %v830 = vmul.f32 %v824, %v785
        %v831 = vmul.f32 %v824, %v786
        %v832 = vmul.f32 %v824, %v787
        %v833 = vmul.f32 %v824, %v788
        %v834 = vmul.f32 %v824, %v789
        %v835 = vmul.f32 %v824, %v790
        %v836 = vmul.f32 %v824, %v791
        %v837 = vmul.f32 %v824, %v792
        %v838 = vmul.f32 %v824, %v793
        %v839 = vadd.f32 %v810, %v825
        %v840 = vadd.f32 %v811, %v826
        %v841 = vadd.f32 %v812, %v827
        %v842 = vadd.f32 %v813, %v828
        %v843 = vadd.f32 %v814, %v829
        %v844 = vadd.f32 %v815, %v830
        %v845 = vadd.f32 %v816, %v831
        %v846 = vadd.f32 %v817, %v832
        %v847 = vadd.f32 %v818, %v833
        %v848 = vadd.f32 %v819, %v834
        %v849 = vadd.f32 %v820, %v835
        %v850 = vadd.f32 %v821, %v836
        %v851 = vadd.f32 %v822, %v837
        %v852 = vadd.f32 %v823, %v838
        %v853 = vstv %s107
        %v854 = vmul.f32 %v853, %v781
        %v855 = vmul.f32 %v853, %v782
        %v856 = vmul.f32 %v853, %v783
        %v857 = vmul.f32 %v853, %v784
        %v858 = vmul.f32 %v853, %v785
        %v859 = vmul.f32 %v853, %v786
        %v860 = vmul.f32 %v853, %v787
        %v861 = vmul.f32 %v853, %v788
        %v862 = vmul.f32 %v853, %v789
        %v863 = vmul.f32 %v853, %v790
        %v864 = vmul.f32 %v853, %v791
        %v865 = vmul.f32 %v853, %v792
        %v866 = vmul.f32 %v853, %v793
        %v867 = vmul.f32 %v853, %v794
        %v868 = vadd.f32 %v839, %v854
        %v869 = vadd.f32 %v840, %v855
        %v870 = vadd.f32 %v841, %v856
        %v871 = vadd.f32 %v842, %v857
        %v872 = vadd.f32 %v843, %v858
        %v873 = vadd.f32 %v844, %v859
        %v874 = vadd.f32 %v845, %v860
        %v875 = vadd.f32 %v846, %v861
        %v876 = vadd.f32 %v847, %v862
        %v877 = vadd.f32 %v848, %v863
        %v878 = vadd.f32 %v849, %v864
        %v879 = vadd.f32 %v850, %v865
        %v880 = vadd.f32 %v851, %v866
        %v881 = vadd.f32 %v852, %v867
        %s882 = sadd.s32 %s251, 512
        %s883 = scalar_lea.vmem [#allocation8], %s882
        %v884 = vld [vmem:[%s883] sm:$0x1]
        %v885 = vld [vmem:[%s883 + $0x1] sm:$0x1]
        %v886 = vld [vmem:[%s883 + $0x2] sm:$0x1]
        %v887 = vld [vmem:[%s883 + $0x3] sm:$0x1]
        %v888 = vld [vmem:[%s883 + $0x4] sm:$0x1]
        %v889 = vld [vmem:[%s883 + $0x5] sm:$0x1]
        %v890 = vld [vmem:[%s883 + $0x6] sm:$0x1]
        %v891 = vld [vmem:[%s883 + $0x7] sm:$0x1]
        %v892 = vld [vmem:[%s883 + $0x8] sm:$0x1]
        %v893 = vld [vmem:[%s883 + $0x9] sm:$0x1]
        %v894 = vld [vmem:[%s883 + $0xa] sm:$0x1]
        %v895 = vld [vmem:[%s883 + $0xb] sm:$0x1]
        %v896 = vld [vmem:[%s883 + $0xc] sm:$0x1]
        %v897 = vld [vmem:[%s883 + $0xd] sm:$0x1]
        %v898 = vld [vmem:[%s883 + $0xe] sm:$0x1]
        %v899 = vld [vmem:[%s883 + $0xf] sm:$0x1]
        %v900 = vstv %s109
        %v901 = vmul.f32 %v900, %v884
        %v902 = vmul.f32 %v900, %v885
        %v903 = vmul.f32 %v900, %v886
        %v904 = vmul.f32 %v900, %v887
        %v905 = vmul.f32 %v900, %v888
        %v906 = vmul.f32 %v900, %v889
        %v907 = vmul.f32 %v900, %v890
        %v908 = vmul.f32 %v900, %v891
        %v909 = vmul.f32 %v900, %v892
        %v910 = vmul.f32 %v900, %v893
        %v911 = vmul.f32 %v900, %v894
        %v912 = vmul.f32 %v900, %v895
        %v913 = vmul.f32 %v900, %v896
        %v914 = vmul.f32 %v900, %v897
        %v915 = vadd.f32 %v868, %v901
        %v916 = vadd.f32 %v869, %v902
        %v917 = vadd.f32 %v870, %v903
        %v918 = vadd.f32 %v871, %v904
        %v919 = vadd.f32 %v872, %v905
        %v920 = vadd.f32 %v873, %v906
        %v921 = vadd.f32 %v874, %v907
        %v922 = vadd.f32 %v875, %v908
        %v923 = vadd.f32 %v876, %v909
        %v924 = vadd.f32 %v877, %v910
        %v925 = vadd.f32 %v878, %v911
        %v926 = vadd.f32 %v879, %v912
        %v927 = vadd.f32 %v880, %v913
        %v928 = vadd.f32 %v881, %v914
        %v929 = vstv %s111
        %v930 = vmul.f32 %v929, %v885
        %v931 = vmul.f32 %v929, %v886
        %v932 = vmul.f32 %v929, %v887
        %v933 = vmul.f32 %v929, %v888
        %v934 = vmul.f32 %v929, %v889
        %v935 = vmul.f32 %v929, %v890
        %v936 = vmul.f32 %v929, %v891
        %v937 = vmul.f32 %v929, %v892
        %v938 = vmul.f32 %v929, %v893
        %v939 = vmul.f32 %v929, %v894
        %v940 = vmul.f32 %v929, %v895
        %v941 = vmul.f32 %v929, %v896
        %v942 = vmul.f32 %v929, %v897
        %v943 = vmul.f32 %v929, %v898
        %v944 = vadd.f32 %v915, %v930
        %v945 = vadd.f32 %v916, %v931
        %v946 = vadd.f32 %v917, %v932
        %v947 = vadd.f32 %v918, %v933
        %v948 = vadd.f32 %v919, %v934
        %v949 = vadd.f32 %v920, %v935
        %v950 = vadd.f32 %v921, %v936
        %v951 = vadd.f32 %v922, %v937
        %v952 = vadd.f32 %v923, %v938
        %v953 = vadd.f32 %v924, %v939
        %v954 = vadd.f32 %v925, %v940
        %v955 = vadd.f32 %v926, %v941
        %v956 = vadd.f32 %v927, %v942
        %v957 = vadd.f32 %v928, %v943
        %v958 = vstv %s113
        %v959 = vmul.f32 %v958, %v886
        %v960 = vmul.f32 %v958, %v887
        %v961 = vmul.f32 %v958, %v888
        %v962 = vmul.f32 %v958, %v889
        %v963 = vmul.f32 %v958, %v890
        %v964 = vmul.f32 %v958, %v891
        %v965 = vmul.f32 %v958, %v892
        %v966 = vmul.f32 %v958, %v893
        %v967 = vmul.f32 %v958, %v894
        %v968 = vmul.f32 %v958, %v895
        %v969 = vmul.f32 %v958, %v896
        %v970 = vmul.f32 %v958, %v897
        %v971 = vmul.f32 %v958, %v898
        %v972 = vmul.f32 %v958, %v899
        %v973 = vadd.f32 %v944, %v959
        %v974 = vadd.f32 %v945, %v960
        %v975 = vadd.f32 %v946, %v961
        %v976 = vadd.f32 %v947, %v962
        %v977 = vadd.f32 %v948, %v963
        %v978 = vadd.f32 %v949, %v964
        %v979 = vadd.f32 %v950, %v965
        %v980 = vadd.f32 %v951, %v966
        %v981 = vadd.f32 %v952, %v967
        %v982 = vadd.f32 %v953, %v968
        %v983 = vadd.f32 %v954, %v969
        %v984 = vadd.f32 %v955, %v970
        %v985 = vadd.f32 %v956, %v971
        %v986 = vadd.f32 %v957, %v972
        %s987 = sadd.s32 %s357, 512
        %s988 = scalar_lea.vmem [#allocation8], %s987
        %v989 = vld [vmem:[%s988] sm:$0x1]
        %v990 = vld [vmem:[%s988 + $0x1] sm:$0x1]
        %v991 = vld [vmem:[%s988 + $0x2] sm:$0x1]
        %v992 = vld [vmem:[%s988 + $0x3] sm:$0x1]
        %v993 = vld [vmem:[%s988 + $0x4] sm:$0x1]
        %v994 = vld [vmem:[%s988 + $0x5] sm:$0x1]
        %v995 = vld [vmem:[%s988 + $0x6] sm:$0x1]
        %v996 = vld [vmem:[%s988 + $0x7] sm:$0x1]
        %v997 = vld [vmem:[%s988 + $0x8] sm:$0x1]
        %v998 = vld [vmem:[%s988 + $0x9] sm:$0x1]
        %v999 = vld [vmem:[%s988 + $0xa] sm:$0x1]
        %v1000 = vld [vmem:[%s988 + $0xb] sm:$0x1]
        %v1001 = vld [vmem:[%s988 + $0xc] sm:$0x1]
        %v1002 = vld [vmem:[%s988 + $0xd] sm:$0x1]
        %v1003 = vld [vmem:[%s988 + $0xe] sm:$0x1]
        %v1004 = vld [vmem:[%s988 + $0xf] sm:$0x1]
        %v1005 = vstv %s115
        %v1006 = vmul.f32 %v1005, %v989
        %v1007 = vmul.f32 %v1005, %v990
        %v1008 = vmul.f32 %v1005, %v991
        %v1009 = vmul.f32 %v1005, %v992
        %v1010 = vmul.f32 %v1005, %v993
        %v1011 = vmul.f32 %v1005, %v994
        %v1012 = vmul.f32 %v1005, %v995
        %v1013 = vmul.f32 %v1005, %v996
        %v1014 = vmul.f32 %v1005, %v997
        %v1015 = vmul.f32 %v1005, %v998
        %v1016 = vmul.f32 %v1005, %v999
        %v1017 = vmul.f32 %v1005, %v1000
        %v1018 = vmul.f32 %v1005, %v1001
        %v1019 = vmul.f32 %v1005, %v1002
        %v1020 = vadd.f32 %v973, %v1006
        %v1021 = vadd.f32 %v974, %v1007
        %v1022 = vadd.f32 %v975, %v1008
        %v1023 = vadd.f32 %v976, %v1009
        %v1024 = vadd.f32 %v977, %v1010
        %v1025 = vadd.f32 %v978, %v1011
        %v1026 = vadd.f32 %v979, %v1012
        %v1027 = vadd.f32 %v980, %v1013
        %v1028 = vadd.f32 %v981, %v1014
        %v1029 = vadd.f32 %v982, %v1015
        %v1030 = vadd.f32 %v983, %v1016
        %v1031 = vadd.f32 %v984, %v1017
        %v1032 = vadd.f32 %v985, %v1018
        %v1033 = vadd.f32 %v986, %v1019
        %v1034 = vstv %s117
        %v1035 = vmul.f32 %v1034, %v990
        %v1036 = vmul.f32 %v1034, %v991
        %v1037 = vmul.f32 %v1034, %v992
        %v1038 = vmul.f32 %v1034, %v993
        %v1039 = vmul.f32 %v1034, %v994
        %v1040 = vmul.f32 %v1034, %v995
        %v1041 = vmul.f32 %v1034, %v996
        %v1042 = vmul.f32 %v1034, %v997
        %v1043 = vmul.f32 %v1034, %v998
        %v1044 = vmul.f32 %v1034, %v999
        %v1045 = vmul.f32 %v1034, %v1000
        %v1046 = vmul.f32 %v1034, %v1001
        %v1047 = vmul.f32 %v1034, %v1002
        %v1048 = vmul.f32 %v1034, %v1003
        %v1049 = vadd.f32 %v1020, %v1035
        %v1050 = vadd.f32 %v1021, %v1036
        %v1051 = vadd.f32 %v1022, %v1037
        %v1052 = vadd.f32 %v1023, %v1038
        %v1053 = vadd.f32 %v1024, %v1039
        %v1054 = vadd.f32 %v1025, %v1040
        %v1055 = vadd.f32 %v1026, %v1041
        %v1056 = vadd.f32 %v1027, %v1042
        %v1057 = vadd.f32 %v1028, %v1043
        %v1058 = vadd.f32 %v1029, %v1044
        %v1059 = vadd.f32 %v1030, %v1045
        %v1060 = vadd.f32 %v1031, %v1046
        %v1061 = vadd.f32 %v1032, %v1047
        %v1062 = vadd.f32 %v1033, %v1048
        %v1063 = vstv %s119
        %v1064 = vmul.f32 %v1063, %v991
        %v1065 = vmul.f32 %v1063, %v992
        %v1066 = vmul.f32 %v1063, %v993
        %v1067 = vmul.f32 %v1063, %v994
        %v1068 = vmul.f32 %v1063, %v995
        %v1069 = vmul.f32 %v1063, %v996
        %v1070 = vmul.f32 %v1063, %v997
        %v1071 = vmul.f32 %v1063, %v998
        %v1072 = vmul.f32 %v1063, %v999
        %v1073 = vmul.f32 %v1063, %v1000
        %v1074 = vmul.f32 %v1063, %v1001
        %v1075 = vmul.f32 %v1063, %v1002
        %v1076 = vmul.f32 %v1063, %v1003
        %v1077 = vmul.f32 %v1063, %v1004
        %v1078 = vadd.f32 %v1049, %v1064
        %v1079 = vadd.f32 %v1050, %v1065
        %v1080 = vadd.f32 %v1051, %v1066
        %v1081 = vadd.f32 %v1052, %v1067
        %v1082 = vadd.f32 %v1053, %v1068
        %v1083 = vadd.f32 %v1054, %v1069
        %v1084 = vadd.f32 %v1055, %v1070
        %v1085 = vadd.f32 %v1056, %v1071
        %v1086 = vadd.f32 %v1057, %v1072
        %v1087 = vadd.f32 %v1058, %v1073
        %v1088 = vadd.f32 %v1059, %v1074
        %v1089 = vadd.f32 %v1060, %v1075
        %v1090 = vadd.f32 %v1061, %v1076
        %v1091 = vadd.f32 %v1062, %v1077
        %s1092 = sadd.s32 %s145, 768
        %s1093 = scalar_lea.vmem [#allocation8], %s1092
        %v1094 = vld [vmem:[%s1093] sm:$0x1]
        %v1095 = vld [vmem:[%s1093 + $0x1] sm:$0x1]
        %v1096 = vld [vmem:[%s1093 + $0x2] sm:$0x1]
        %v1097 = vld [vmem:[%s1093 + $0x3] sm:$0x1]
        %v1098 = vld [vmem:[%s1093 + $0x4] sm:$0x1]
        %v1099 = vld [vmem:[%s1093 + $0x5] sm:$0x1]
        %v1100 = vld [vmem:[%s1093 + $0x6] sm:$0x1]
        %v1101 = vld [vmem:[%s1093 + $0x7] sm:$0x1]
        %v1102 = vld [vmem:[%s1093 + $0x8] sm:$0x1]
        %v1103 = vld [vmem:[%s1093 + $0x9] sm:$0x1]
        %v1104 = vld [vmem:[%s1093 + $0xa] sm:$0x1]
        %v1105 = vld [vmem:[%s1093 + $0xb] sm:$0x1]
        %v1106 = vld [vmem:[%s1093 + $0xc] sm:$0x1]
        %v1107 = vld [vmem:[%s1093 + $0xd] sm:$0x1]
        %v1108 = vld [vmem:[%s1093 + $0xe] sm:$0x1]
        %v1109 = vld [vmem:[%s1093 + $0xf] sm:$0x1]
        %v1110 = vstv %s122
        %v1111 = vmul.f32 %v1110, %v1094
        %v1112 = vmul.f32 %v1110, %v1095
        %v1113 = vmul.f32 %v1110, %v1096
        %v1114 = vmul.f32 %v1110, %v1097
        %v1115 = vmul.f32 %v1110, %v1098
        %v1116 = vmul.f32 %v1110, %v1099
        %v1117 = vmul.f32 %v1110, %v1100
        %v1118 = vmul.f32 %v1110, %v1101
        %v1119 = vmul.f32 %v1110, %v1102
        %v1120 = vmul.f32 %v1110, %v1103
        %v1121 = vmul.f32 %v1110, %v1104
        %v1122 = vmul.f32 %v1110, %v1105
        %v1123 = vmul.f32 %v1110, %v1106
        %v1124 = vmul.f32 %v1110, %v1107
        %v1125 = vadd.f32 %v1078, %v1111
        %v1126 = vadd.f32 %v1079, %v1112
        %v1127 = vadd.f32 %v1080, %v1113
        %v1128 = vadd.f32 %v1081, %v1114
        %v1129 = vadd.f32 %v1082, %v1115
        %v1130 = vadd.f32 %v1083, %v1116
        %v1131 = vadd.f32 %v1084, %v1117
        %v1132 = vadd.f32 %v1085, %v1118
        %v1133 = vadd.f32 %v1086, %v1119
        %v1134 = vadd.f32 %v1087, %v1120
        %v1135 = vadd.f32 %v1088, %v1121
        %v1136 = vadd.f32 %v1089, %v1122
        %v1137 = vadd.f32 %v1090, %v1123
        %v1138 = vadd.f32 %v1091, %v1124
        %v1139 = vstv %s124
        %v1140 = vmul.f32 %v1139, %v1095
        %v1141 = vmul.f32 %v1139, %v1096
        %v1142 = vmul.f32 %v1139, %v1097
        %v1143 = vmul.f32 %v1139, %v1098
        %v1144 = vmul.f32 %v1139, %v1099
        %v1145 = vmul.f32 %v1139, %v1100
        %v1146 = vmul.f32 %v1139, %v1101
        %v1147 = vmul.f32 %v1139, %v1102
        %v1148 = vmul.f32 %v1139, %v1103
        %v1149 = vmul.f32 %v1139, %v1104
        %v1150 = vmul.f32 %v1139, %v1105
        %v1151 = vmul.f32 %v1139, %v1106
        %v1152 = vmul.f32 %v1139, %v1107
        %v1153 = vmul.f32 %v1139, %v1108
        %v1154 = vadd.f32 %v1125, %v1140
        %v1155 = vadd.f32 %v1126, %v1141
        %v1156 = vadd.f32 %v1127, %v1142
        %v1157 = vadd.f32 %v1128, %v1143
        %v1158 = vadd.f32 %v1129, %v1144
        %v1159 = vadd.f32 %v1130, %v1145
        %v1160 = vadd.f32 %v1131, %v1146
        %v1161 = vadd.f32 %v1132, %v1147
        %v1162 = vadd.f32 %v1133, %v1148
        %v1163 = vadd.f32 %v1134, %v1149
        %v1164 = vadd.f32 %v1135, %v1150
        %v1165 = vadd.f32 %v1136, %v1151
        %v1166 = vadd.f32 %v1137, %v1152
        %v1167 = vadd.f32 %v1138, %v1153
        %v1168 = vstv %s126
        %v1169 = vmul.f32 %v1168, %v1096
        %v1170 = vmul.f32 %v1168, %v1097
        %v1171 = vmul.f32 %v1168, %v1098
        %v1172 = vmul.f32 %v1168, %v1099
        %v1173 = vmul.f32 %v1168, %v1100
        %v1174 = vmul.f32 %v1168, %v1101
        %v1175 = vmul.f32 %v1168, %v1102
        %v1176 = vmul.f32 %v1168, %v1103
        %v1177 = vmul.f32 %v1168, %v1104
        %v1178 = vmul.f32 %v1168, %v1105
        %v1179 = vmul.f32 %v1168, %v1106
        %v1180 = vmul.f32 %v1168, %v1107
        %v1181 = vmul.f32 %v1168, %v1108
        %v1182 = vmul.f32 %v1168, %v1109
        %v1183 = vadd.f32 %v1154, %v1169
        %v1184 = vadd.f32 %v1155, %v1170
        %v1185 = vadd.f32 %v1156, %v1171
        %v1186 = vadd.f32 %v1157, %v1172
        %v1187 = vadd.f32 %v1158, %v1173
        %v1188 = vadd.f32 %v1159, %v1174
        %v1189 = vadd.f32 %v1160, %v1175
        %v1190 = vadd.f32 %v1161, %v1176
        %v1191 = vadd.f32 %v1162, %v1177
        %v1192 = vadd.f32 %v1163, %v1178
        %v1193 = vadd.f32 %v1164, %v1179
        %v1194 = vadd.f32 %v1165, %v1180
        %v1195 = vadd.f32 %v1166, %v1181
        %v1196 = vadd.f32 %v1167, %v1182
        %s1197 = sadd.s32 %s251, 768
        %s1198 = scalar_lea.vmem [#allocation8], %s1197
        %v1199 = vld [vmem:[%s1198] sm:$0x1]
        %v1200 = vld [vmem:[%s1198 + $0x1] sm:$0x1]
        %v1201 = vld [vmem:[%s1198 + $0x2] sm:$0x1]
        %v1202 = vld [vmem:[%s1198 + $0x3] sm:$0x1]
        %v1203 = vld [vmem:[%s1198 + $0x4] sm:$0x1]
        %v1204 = vld [vmem:[%s1198 + $0x5] sm:$0x1]
        %v1205 = vld [vmem:[%s1198 + $0x6] sm:$0x1]
        %v1206 = vld [vmem:[%s1198 + $0x7] sm:$0x1]
        %v1207 = vld [vmem:[%s1198 + $0x8] sm:$0x1]
        %v1208 = vld [vmem:[%s1198 + $0x9] sm:$0x1]
        %v1209 = vld [vmem:[%s1198 + $0xa] sm:$0x1]
        %v1210 = vld [vmem:[%s1198 + $0xb] sm:$0x1]
        %v1211 = vld [vmem:[%s1198 + $0xc] sm:$0x1]
        %v1212 = vld [vmem:[%s1198 + $0xd] sm:$0x1]
        %v1213 = vld [vmem:[%s1198 + $0xe] sm:$0x1]
        %v1214 = vld [vmem:[%s1198 + $0xf] sm:$0x1]
        %v1215 = vstv %s128
        %v1216 = vmul.f32 %v1215, %v1199
        %v1217 = vmul.f32 %v1215, %v1200
        %v1218 = vmul.f32 %v1215, %v1201
        %v1219 = vmul.f32 %v1215, %v1202
        %v1220 = vmul.f32 %v1215, %v1203
        %v1221 = vmul.f32 %v1215, %v1204
        %v1222 = vmul.f32 %v1215, %v1205
        %v1223 = vmul.f32 %v1215, %v1206
        %v1224 = vmul.f32 %v1215, %v1207
        %v1225 = vmul.f32 %v1215, %v1208
        %v1226 = vmul.f32 %v1215, %v1209
        %v1227 = vmul.f32 %v1215, %v1210
        %v1228 = vmul.f32 %v1215, %v1211
        %v1229 = vmul.f32 %v1215, %v1212
        %v1230 = vadd.f32 %v1183, %v1216
        %v1231 = vadd.f32 %v1184, %v1217
        %v1232 = vadd.f32 %v1185, %v1218
        %v1233 = vadd.f32 %v1186, %v1219
        %v1234 = vadd.f32 %v1187, %v1220
        %v1235 = vadd.f32 %v1188, %v1221
        %v1236 = vadd.f32 %v1189, %v1222
        %v1237 = vadd.f32 %v1190, %v1223
        %v1238 = vadd.f32 %v1191, %v1224
        %v1239 = vadd.f32 %v1192, %v1225
        %v1240 = vadd.f32 %v1193, %v1226
        %v1241 = vadd.f32 %v1194, %v1227
        %v1242 = vadd.f32 %v1195, %v1228
        %v1243 = vadd.f32 %v1196, %v1229
        %v1244 = vstv %s130
        %v1245 = vmul.f32 %v1244, %v1200
        %v1246 = vmul.f32 %v1244, %v1201
        %v1247 = vmul.f32 %v1244, %v1202
        %v1248 = vmul.f32 %v1244, %v1203
        %v1249 = vmul.f32 %v1244, %v1204
        %v1250 = vmul.f32 %v1244, %v1205
        %v1251 = vmul.f32 %v1244, %v1206
        %v1252 = vmul.f32 %v1244, %v1207
        %v1253 = vmul.f32 %v1244, %v1208
        %v1254 = vmul.f32 %v1244, %v1209
        %v1255 = vmul.f32 %v1244, %v1210
        %v1256 = vmul.f32 %v1244, %v1211
        %v1257 = vmul.f32 %v1244, %v1212
        %v1258 = vmul.f32 %v1244, %v1213
        %v1259 = vadd.f32 %v1230, %v1245
        %v1260 = vadd.f32 %v1231, %v1246
        %v1261 = vadd.f32 %v1232, %v1247
        %v1262 = vadd.f32 %v1233, %v1248
        %v1263 = vadd.f32 %v1234, %v1249
        %v1264 = vadd.f32 %v1235, %v1250
        %v1265 = vadd.f32 %v1236, %v1251
        %v1266 = vadd.f32 %v1237, %v1252
        %v1267 = vadd.f32 %v1238, %v1253
        %v1268 = vadd.f32 %v1239, %v1254
        %v1269 = vadd.f32 %v1240, %v1255
        %v1270 = vadd.f32 %v1241, %v1256
        %v1271 = vadd.f32 %v1242, %v1257
        %v1272 = vadd.f32 %v1243, %v1258
        %v1273 = vstv %s132
        %v1274 = vmul.f32 %v1273, %v1201
        %v1275 = vmul.f32 %v1273, %v1202
        %v1276 = vmul.f32 %v1273, %v1203
        %v1277 = vmul.f32 %v1273, %v1204
        %v1278 = vmul.f32 %v1273, %v1205
        %v1279 = vmul.f32 %v1273, %v1206
        %v1280 = vmul.f32 %v1273, %v1207
        %v1281 = vmul.f32 %v1273, %v1208
        %v1282 = vmul.f32 %v1273, %v1209
        %v1283 = vmul.f32 %v1273, %v1210
        %v1284 = vmul.f32 %v1273, %v1211
        %v1285 = vmul.f32 %v1273, %v1212
        %v1286 = vmul.f32 %v1273, %v1213
        %v1287 = vmul.f32 %v1273, %v1214
        %v1288 = vadd.f32 %v1259, %v1274
        %v1289 = vadd.f32 %v1260, %v1275
        %v1290 = vadd.f32 %v1261, %v1276
        %v1291 = vadd.f32 %v1262, %v1277
        %v1292 = vadd.f32 %v1263, %v1278
        %v1293 = vadd.f32 %v1264, %v1279
        %v1294 = vadd.f32 %v1265, %v1280
        %v1295 = vadd.f32 %v1266, %v1281
        %v1296 = vadd.f32 %v1267, %v1282
        %v1297 = vadd.f32 %v1268, %v1283
        %v1298 = vadd.f32 %v1269, %v1284
        %v1299 = vadd.f32 %v1270, %v1285
        %v1300 = vadd.f32 %v1271, %v1286
        %v1301 = vadd.f32 %v1272, %v1287
        %s1302 = sadd.s32 %s357, 768
        %s1303 = scalar_lea.vmem [#allocation8], %s1302
        %v1304 = vld [vmem:[%s1303] sm:$0x1]
        %v1305 = vld [vmem:[%s1303 + $0x1] sm:$0x1]
        %v1306 = vld [vmem:[%s1303 + $0x2] sm:$0x1]
        %v1307 = vld [vmem:[%s1303 + $0x3] sm:$0x1]
        %v1308 = vld [vmem:[%s1303 + $0x4] sm:$0x1]
        %v1309 = vld [vmem:[%s1303 + $0x5] sm:$0x1]
        %v1310 = vld [vmem:[%s1303 + $0x6] sm:$0x1]
        %v1311 = vld [vmem:[%s1303 + $0x7] sm:$0x1]
        %v1312 = vld [vmem:[%s1303 + $0x8] sm:$0x1]
        %v1313 = vld [vmem:[%s1303 + $0x9] sm:$0x1]
        %v1314 = vld [vmem:[%s1303 + $0xa] sm:$0x1]
        %v1315 = vld [vmem:[%s1303 + $0xb] sm:$0x1]
        %v1316 = vld [vmem:[%s1303 + $0xc] sm:$0x1]
        %v1317 = vld [vmem:[%s1303 + $0xd] sm:$0x1]
        %v1318 = vld [vmem:[%s1303 + $0xe] sm:$0x1]
        %v1319 = vld [vmem:[%s1303 + $0xf] sm:$0x1]
        %v1320 = vstv %s134
        %v1321 = vmul.f32 %v1320, %v1304
        %v1322 = vmul.f32 %v1320, %v1305
        %v1323 = vmul.f32 %v1320, %v1306
        %v1324 = vmul.f32 %v1320, %v1307
        %v1325 = vmul.f32 %v1320, %v1308
        %v1326 = vmul.f32 %v1320, %v1309
        %v1327 = vmul.f32 %v1320, %v1310
        %v1328 = vmul.f32 %v1320, %v1311
        %v1329 = vmul.f32 %v1320, %v1312
        %v1330 = vmul.f32 %v1320, %v1313
        %v1331 = vmul.f32 %v1320, %v1314
        %v1332 = vmul.f32 %v1320, %v1315
        %v1333 = vmul.f32 %v1320, %v1316
        %v1334 = vmul.f32 %v1320, %v1317
        %v1335 = vadd.f32 %v1288, %v1321
        %v1336 = vadd.f32 %v1289, %v1322
        %v1337 = vadd.f32 %v1290, %v1323
        %v1338 = vadd.f32 %v1291, %v1324
        %v1339 = vadd.f32 %v1292, %v1325
        %v1340 = vadd.f32 %v1293, %v1326
        %v1341 = vadd.f32 %v1294, %v1327
        %v1342 = vadd.f32 %v1295, %v1328
        %v1343 = vadd.f32 %v1296, %v1329
        %v1344 = vadd.f32 %v1297, %v1330
        %v1345 = vadd.f32 %v1298, %v1331
        %v1346 = vadd.f32 %v1299, %v1332
        %v1347 = vadd.f32 %v1300, %v1333
        %v1348 = vadd.f32 %v1301, %v1334
        %v1349 = vstv %s136
        %v1350 = vmul.f32 %v1349, %v1305
        %v1351 = vmul.f32 %v1349, %v1306
        %v1352 = vmul.f32 %v1349, %v1307
        %v1353 = vmul.f32 %v1349, %v1308
        %v1354 = vmul.f32 %v1349, %v1309
        %v1355 = vmul.f32 %v1349, %v1310
        %v1356 = vmul.f32 %v1349, %v1311
        %v1357 = vmul.f32 %v1349, %v1312
        %v1358 = vmul.f32 %v1349, %v1313
        %v1359 = vmul.f32 %v1349, %v1314
        %v1360 = vmul.f32 %v1349, %v1315
        %v1361 = vmul.f32 %v1349, %v1316
        %v1362 = vmul.f32 %v1349, %v1317
        %v1363 = vmul.f32 %v1349, %v1318
        %v1364 = vadd.f32 %v1335, %v1350
        %v1365 = vadd.f32 %v1336, %v1351
        %v1366 = vadd.f32 %v1337, %v1352
        %v1367 = vadd.f32 %v1338, %v1353
        %v1368 = vadd.f32 %v1339, %v1354
        %v1369 = vadd.f32 %v1340, %v1355
        %v1370 = vadd.f32 %v1341, %v1356
        %v1371 = vadd.f32 %v1342, %v1357
        %v1372 = vadd.f32 %v1343, %v1358
        %v1373 = vadd.f32 %v1344, %v1359
        %v1374 = vadd.f32 %v1345, %v1360
        %v1375 = vadd.f32 %v1346, %v1361
        %v1376 = vadd.f32 %v1347, %v1362
        %v1377 = vadd.f32 %v1348, %v1363
        %v1378 = vstv %s138
        %v1379 = vmul.f32 %v1378, %v1306
        %v1380 = vmul.f32 %v1378, %v1307
        %v1381 = vmul.f32 %v1378, %v1308
        %v1382 = vmul.f32 %v1378, %v1309
        %v1383 = vmul.f32 %v1378, %v1310
        %v1384 = vmul.f32 %v1378, %v1311
        %v1385 = vmul.f32 %v1378, %v1312
        %v1386 = vmul.f32 %v1378, %v1313
        %v1387 = vmul.f32 %v1378, %v1314
        %v1388 = vmul.f32 %v1378, %v1315
        %v1389 = vmul.f32 %v1378, %v1316
        %v1390 = vmul.f32 %v1378, %v1317
        %v1391 = vmul.f32 %v1378, %v1318
        %v1392 = vmul.f32 %v1378, %v1319
        %v1393 = vadd.f32 %v1364, %v1379
        %v1394 = vadd.f32 %v1365, %v1380
        %v1395 = vadd.f32 %v1366, %v1381
        %v1396 = vadd.f32 %v1367, %v1382
        %v1397 = vadd.f32 %v1368, %v1383
        %v1398 = vadd.f32 %v1369, %v1384
        %v1399 = vadd.f32 %v1370, %v1385
        %v1400 = vadd.f32 %v1371, %v1386
        %v1401 = vadd.f32 %v1372, %v1387
        %v1402 = vadd.f32 %v1373, %v1388
        %v1403 = vadd.f32 %v1374, %v1389
        %v1404 = vadd.f32 %v1375, %v1390
        %v1405 = vadd.f32 %v1376, %v1391
        %v1406 = vadd.f32 %v1377, %v1392
        %v1407 = vstv %s62
        %v1408 = vadd.f32 %v1393, %v1407
        %v1409 = vadd.f32 %v1394, %v1407
        %v1410 = vadd.f32 %v1395, %v1407
        %v1411 = vadd.f32 %v1396, %v1407
        %v1412 = vadd.f32 %v1397, %v1407
        %v1413 = vadd.f32 %v1398, %v1407
        %v1414 = vadd.f32 %v1399, %v1407
        %v1415 = vadd.f32 %v1400, %v1407
        %v1416 = vadd.f32 %v1401, %v1407
        %v1417 = vadd.f32 %v1402, %v1407
        %v1418 = vadd.f32 %v1403, %v1407
        %v1419 = vadd.f32 %v1404, %v1407
        %v1420 = vadd.f32 %v1405, %v1407
        %v1421 = vadd.f32 %v1406, %v1407
        %v1422 = vmax.f32 %v1408, 0.0
        %v1423 = vmax.f32 %v1409, 0.0
        %v1424 = vmax.f32 %v1410, 0.0
        %v1425 = vmax.f32 %v1411, 0.0
        %v1426 = vmax.f32 %v1412, 0.0
        %v1427 = vmax.f32 %v1413, 0.0
        %v1428 = vmax.f32 %v1414, 0.0
        %v1429 = vmax.f32 %v1415, 0.0
        %v1430 = vmax.f32 %v1416, 0.0
        %v1431 = vmax.f32 %v1417, 0.0
        %v1432 = vmax.f32 %v1418, 0.0
        %v1433 = vmax.f32 %v1419, 0.0
        %v1434 = vmax.f32 %v1420, 0.0
        %v1435 = vmax.f32 %v1421, 0.0
        %s1436 = smul.u32 %s140, 14
        %s1437 = smul.u32 %s57, 196
        %s1438 = sadd.s32 %s1436, %s1437
        %s1439 = scalar_lea.vmem [#allocation9], %s1438
        %1440 = vst [vmem:[%s1439] sm:$0x1] %v1422
        %1441 = vst [vmem:[%s1439 + $0x1] sm:$0x1] %v1423
        %1442 = vst [vmem:[%s1439 + $0x2] sm:$0x1] %v1424
        %1443 = vst [vmem:[%s1439 + $0x3] sm:$0x1] %v1425
        %1444 = vst [vmem:[%s1439 + $0x4] sm:$0x1] %v1426
        %1445 = vst [vmem:[%s1439 + $0x5] sm:$0x1] %v1427
        %1446 = vst [vmem:[%s1439 + $0x6] sm:$0x1] %v1428
        %1447 = vst [vmem:[%s1439 + $0x7] sm:$0x1] %v1429
        %1448 = vst [vmem:[%s1439 + $0x8] sm:$0x1] %v1430
        %1449 = vst [vmem:[%s1439 + $0x9] sm:$0x1] %v1431
        %1450 = vst [vmem:[%s1439 + $0xa] sm:$0x1] %v1432
        %1451 = vst [vmem:[%s1439 + $0xb] sm:$0x1] %v1433
        %1452 = vst [vmem:[%s1439 + $0xc] sm:$0x1] %v1434
        %1453 = vst [vmem:[%s1439 + $0xd] sm:$0x1] %v1435
      $region37: #{tpu_custom_call.1} parent=29 // loop_footer
        %s144 = sadd.s32 1, %s140
      $region38: #{tpu_custom_call.1} parent=29 // loop_footer_branch
        %139 = sbr.rel target = $region34
      $region39: #{tpu_custom_call.1} parent=29 // loop_exit
        _
    $region30: #{tpu_custom_call.1} parent=1 // loop_footer
      %s61 = sadd.s32 1, %s57
    $region31: #{tpu_custom_call.1} parent=1 // loop_footer_branch
      %56 = sbr.rel target = $region27
    $region32: #{tpu_custom_call.1} parent=1 // loop_exit
      _
    // Predicated region
    $region40: #{tpu_custom_call.1} parent=1 // pred_check
      _
    $region41: #{tpu_custom_call.1} parent=1 // pred_check_branch
      %1455 = sbr.rel (0) target = $region43
    $region42: #{tpu_custom_call.1} parent=1 // pred_region
      %1457 = vsyncadd [#allocation4], 0
      %s1458 = sshll.u32 [#allocation9], 4
      %s1459 = int_to_ptr.vmem [resolvable:$true] %s1458
      %s1460 = sshll.u32 %s3, 4
      %s1461 = int_to_ptr.hbm [resolvable:$true] %s1460
      %1466 = dma.vmem_to_hbm [thread:$0]  %s1459, 25088, %s1461, [#allocation4], 16, 16, 1
    $region43: #{tpu_custom_call.1} parent=1 // pred_fallthru
      _
    // Predicated region
    $region44: #{tpu_custom_call.1} parent=1 // pred_check
      _
    $region45: #{tpu_custom_call.1} parent=1 // pred_check_branch
      %1468 = sbr.rel (0) target = $region47
    $region46: #{tpu_custom_call.1} parent=1 // pred_region
      %1470 = dma.done [#allocation4], 25088
    $region47: #{tpu_custom_call.1} parent=1 // pred_fallthru
      _
    %1471 = vsyncpa [#allocation3], 1
    %1472 = vsyncpa [#allocation4], 1
    %1473 = vsyncpa [#allocation5], 1
    %1474 = vsyncpa [#allocation7], 1

</llo_original>
